<compile_context>
chip_gen: v6e
topology: v6e:2x2x1
jax: 0.10.0
libtpu: 0.0.40
codegen_flags: <defaults>
</compile_context>

<pallas_src>
from functools import partial

import jax
import jax.numpy as jnp
from jax.experimental import pallas as pl
from jax.experimental.pallas import tpu as pltpu


def _round_up(a, b):
    return (a + b - 1) // b * b


# ---------------------------------------------------------------------------
# Fused kernel: projection + per-head attention + out_proj for ONE batch elem
# ---------------------------------------------------------------------------
def _fused_attention_kernel(x_ref, w12_ref, b12_ref, wo_ref, bo_ref, o_ref,
                            *, n_heads, head_dim, kv_len):
    """
    x_ref   : (Sp, D)   f32   input tokens (rows possibly padded to Sp)
    w12_ref : (D, 3D)   bf16  folded (outer linear ∘ in_proj) weight,
                              columns ordered [q | k | v], heads contiguous,
                              1/sqrt(head_dim) folded into the q columns
    b12_ref : (1, 3D)   f32   folded bias
    wo_ref  : (D, D)    bf16  out_proj weight (pre-transposed)
    bo_ref  : (1, D)    f32   out_proj bias
    o_ref   : (Sp, D)   f32   output
    """
    H, hd = n_heads, head_dim
    D = H * hd
    Sp = x_ref.shape[0]

    x = x_ref[...].astype(jnp.bfloat16)

    # One wide, lane-dense projection GEMM: (Sp, D) @ (D, 3D) + bias (f32 acc).
    qkv = jnp.dot(x, w12_ref[...], preferred_element_type=jnp.float32)
    qkv = qkv + b12_ref[...]                                   # (Sp, 3D) f32

    need_mask = kv_len < Sp                                    # static
    if need_mask:
        key_idx = jax.lax.broadcasted_iota(jnp.int32, (Sp, Sp), 1)
        key_mask = key_idx < kv_len

    acc = jnp.zeros((Sp, D), jnp.float32)
    for h in range(H):                                         # unrolled, H small
        q_h = qkv[:, h * hd:(h + 1) * hd].astype(jnp.bfloat16)          # (Sp, hd)
        k_h = qkv[:, D + h * hd:D + (h + 1) * hd].astype(jnp.bfloat16)  # (Sp, hd)
        v_h = qkv[:, 2 * D + h * hd:2 * D + (h + 1) * hd].astype(jnp.bfloat16)

        # scores = q_h @ k_h^T  (scale already folded into q weights)
        s = jax.lax.dot_general(q_h, k_h, (((1,), (1,)), ((), ())),
                                preferred_element_type=jnp.float32)     # (Sp, Sp)
        if need_mask:
            s = jnp.where(key_mask, s, -1e30)

        m = jnp.max(s, axis=-1, keepdims=True)
        p = jnp.exp(s - m)
        l = jnp.sum(p, axis=-1, keepdims=True)
        p = p * pl.reciprocal(l, approx=True)      # dropout = identity (inference)

        o_h = jnp.dot(p.astype(jnp.bfloat16), v_h,
                      preferred_element_type=jnp.float32)               # (Sp, hd)

        # Fold out_proj per head: avoids lane-narrow (hd=32) stores / concat.
        acc = acc + jnp.dot(o_h.astype(jnp.bfloat16),
                            wo_ref[h * hd:(h + 1) * hd, :],
                            preferred_element_type=jnp.float32)          # (Sp, D)

    o_ref[...] = (acc + bo_ref[...]).astype(o_ref.dtype)


# ---------------------------------------------------------------------------
# Parameter preparation (one-time): algebraic folding + layout + bf16 cast
# ---------------------------------------------------------------------------
def prepare_params(p, *, n_heads):
    """Fold (outer Linear) ∘ (MHA in_proj) into one weight/bias per group.

    y_g = (x @ W1_g^T + b1_g) @ W2_g^T + b2_g = x @ (W1_g^T W2_g^T) + (b1_g W2_g^T + b2_g)
    The q group additionally absorbs the 1/sqrt(head_dim) attention scale.
    Composition is done in f32, the bf16 cast happens once at the end.
    """
    D = p['wq'].shape[0]
    hd = D // n_heads
    scale = 1.0 / float(hd) ** 0.5
    prec = jax.lax.Precision.HIGHEST

    w_in = p['w_in'].reshape(3, D, D).astype(jnp.float32)   # rows ordered [q; k; v]
    b_in = p['b_in'].reshape(3, D).astype(jnp.float32)
    outer = [(p['wq'], p['bq']), (p['wk'], p['bk']), (p['wv'], p['bv'])]

    folded_w, folded_b = [], []
    for g in range(3):
        w1, b1 = outer[g]
        w2t = w_in[g].T                                       # (D, D)
        wf = jnp.dot(w1.astype(jnp.float32).T, w2t, precision=prec)   # (D, D)
        bf = jnp.dot(b1.astype(jnp.float32), w2t, precision=prec) + b_in[g]
        if g == 0:                                            # fold softmax scale into q
            wf = wf * scale
            bf = bf * scale
        folded_w.append(wf)
        folded_b.append(bf)

    w12 = jnp.concatenate(folded_w, axis=1).astype(jnp.bfloat16)        # (D, 3D)
    b12 = jnp.concatenate(folded_b).reshape(1, 3 * D).astype(jnp.float32)
    wo = p['w_out'].astype(jnp.float32).T.astype(jnp.bfloat16)          # (D, D)
    bo = p['b_out'].reshape(1, D).astype(jnp.float32)
    return dict(w12=w12, b12=b12, wo=wo, bo=bo)


# ---------------------------------------------------------------------------
# Full forward pass (matches Attention.forward at inference) — ONE pallas_call
# ---------------------------------------------------------------------------
def attention_forward(x, prep, *, n_heads):
    B, S, D = x.shape
    assert D % n_heads == 0
    hd = D // n_heads
    assert prep['w12'].shape == (D, 3 * D)

    Sp = _round_up(max(S, 8), 8)                 # sublane-align the token rows
    xp = x if Sp == S else jnp.pad(x, ((0, 0), (0, Sp - S), (0, 0)))

    kernel = partial(_fused_attention_kernel,
                     n_heads=n_heads, head_dim=hd, kv_len=S)

    out = pl.pallas_call(
        kernel,
        out_shape=jax.ShapeDtypeStruct((B, Sp, D), jnp.float32),
        grid_spec=pltpu.PrefetchScalarGridSpec(
            num_scalar_prefetch=0,
            grid=(B,),
            in_specs=[
                pl.BlockSpec((None, Sp, D), lambda b: (b, 0, 0)),   # x
                pl.BlockSpec((D, 3 * D), lambda b: (0, 0)),          # w12
                pl.BlockSpec((1, 3 * D), lambda b: (0, 0)),          # b12
                pl.BlockSpec((D, D), lambda b: (0, 0)),              # wo
                pl.BlockSpec((1, D), lambda b: (0, 0)),              # bo
            ],
            out_specs=pl.BlockSpec((None, Sp, D), lambda b: (b, 0, 0)),
        ),
        compiler_params=pltpu.CompilerParams(
            dimension_semantics=("parallel",)),
    )(xp, prep['w12'], prep['b12'], prep['wo'], prep['bo'])
    return out if Sp == S else out[:, :S, :]


# ---------------------------------------------------------------------------
# Pure-JAX f32 reference mirroring the PyTorch module
# ---------------------------------------------------------------------------
def ref_forward(x, p, n_heads):
    prec = jax.lax.Precision.HIGHEST
    B, S, D = x.shape
    hd = D // n_heads

    def lin(t, w, b):
        return jnp.einsum('bsd,ed->bse', t, w, precision=prec) + b

    q = lin(x, p['wq'], p['bq'])
    k = lin(x, p['wk'], p['bk'])
    v = lin(x, p['wv'], p['bv'])
    wq_in, wk_in, wv_in = jnp.split(p['w_in'], 3, axis=0)
    bq_in, bk_in, bv_in = jnp.split(p['b_in'], 3)
    q = lin(q, wq_in, bq_in)
    k = lin(k, wk_in, bk_in)
    v = lin(v, wv_in, bv_in)

    def heads(t):
        return t.reshape(B, S, n_heads, hd).transpose(0, 2, 1, 3)

    qh, kh, vh = heads(q), heads(k), heads(v)
    s = jnp.einsum('bhqd,bhkd->bhqk', qh, kh, precision=prec) / jnp.sqrt(hd)
    pw = jax.nn.softmax(s, axis=-1)
    o = jnp.einsum('bhqk,bhkd->bhqd', pw, vh, precision=prec)
    o = o.transpose(0, 2, 1, 3).reshape(B, S, D)
    return jnp.einsum('bsd,ed->bse', o, p['w_out'], precision=prec) + p['b_out']


if __name__ == "__main__":
    key = jax.random.PRNGKey(0)
    keys = jax.random.split(key, 12)
    B, S, D, H = 2, 16, 128, 4   # dim=128, n_heads=4, head_dim=32

    def init(k, shape, fan_in):
        return jax.random.normal(k, shape, jnp.float32) / jnp.sqrt(jnp.float32(fan_in))

    params = {
        'wq': init(keys[0], (D, D), D), 'bq': init(keys[1], (D,), D),
        'wk': init(keys[2], (D, D), D), 'bk': init(keys[3], (D,), D),
        'wv': init(keys[4], (D, D), D), 'bv': init(keys[5], (D,), D),
        'w_in': init(keys[6], (3 * D, D), D), 'b_in': init(keys[7], (3 * D,), D),
        'w_out': init(keys[8], (D, D), D), 'b_out': init(keys[9], (D,), D),
    }
    x = jax.random.normal(keys[10], (B, S, D), jnp.float32)

    prep = prepare_params(params, n_heads=H)
    fwd = jax.jit(partial(attention_forward, n_heads=H))
    out = jax.block_until_ready(fwd(x, prep))
    assert out.shape == (B, S, D), out.shape

    ref = ref_forward(x, params, H)
    err = jnp.max(jnp.abs(out - ref))
    # bf16 MXU operands with f32 accumulation (weights composed in f32 before
    # the single bf16 cast) -> small deviation from the f32 reference.
    if not jnp.allclose(out, ref, rtol=5e-2, atol=5e-2):
        raise AssertionError(f"mismatch vs reference, max abs err={err}")

    print("KERNEL_OK")
</pallas_src>

<mosaic_0001>
module attributes {stable_mosaic.version = 11 : i64} {
  func.func @_fused_attention_kernel(%arg0: i32, %arg1: memref<1x16x128xf32, #tpu.memory_space<vmem>>, %arg2: memref<128x384xbf16, #tpu.memory_space<vmem>>, %arg3: memref<1x384xf32, #tpu.memory_space<vmem>>, %arg4: memref<128x128xbf16, #tpu.memory_space<vmem>>, %arg5: memref<1x128xf32, #tpu.memory_space<vmem>>, %arg6: memref<1x16x128xf32, #tpu.memory_space<vmem>>) attributes {dimension_semantics = [#tpu.dimension_semantics<parallel>], iteration_bounds = array<i64: 2>, scalar_prefetch = 0 : i64, scratch_operands = 0 : i64, tpu.core_type = #tpu.core_type<tc>, window_params = [{transform_indices = @transform_0, window_bounds = array<i64: 1, 16, 128>}, {pipeline_mode = #tpu.pipeline_mode<synchronous>, transform_indices = @transform_1, window_bounds = array<i64: 128, 384>}, {pipeline_mode = #tpu.pipeline_mode<synchronous>, transform_indices = @transform_2, window_bounds = array<i64: 1, 384>}, {pipeline_mode = #tpu.pipeline_mode<synchronous>, transform_indices = @transform_3, window_bounds = array<i64: 128, 128>}, {pipeline_mode = #tpu.pipeline_mode<synchronous>, transform_indices = @transform_4, window_bounds = array<i64: 1, 128>}, {transform_indices = @transform_5, window_bounds = array<i64: 1, 16, 128>}]} {
    %c0 = arith.constant 0 : index
    %c0_0 = arith.constant 0 : index
    %c0_1 = arith.constant 0 : index
    %0 = vector.load %arg1[%c0, %c0_0, %c0_1] : memref<1x16x128xf32, #tpu.memory_space<vmem>>, vector<1x16x128xf32>
    %1 = vector.shape_cast %0 : vector<1x16x128xf32> to vector<16x128xf32>
    %2 = arith.truncf %1 : vector<16x128xf32> to vector<16x128xbf16>
    %c0_2 = arith.constant 0 : index
    %c0_3 = arith.constant 0 : index
    %3 = vector.load %arg2[%c0_2, %c0_3] : memref<128x384xbf16, #tpu.memory_space<vmem>>, vector<128x384xbf16>
    %cst = arith.constant dense<0.000000e+00> : vector<16x384xf32>
    %4 = tpu.matmul %2, %3, %cst {dimension_numbers = #tpu.dot_dimension_numbers<[1], [0], [0], [1], [0, 0, 1, 1], [], []>} : vector<16x128xbf16>, vector<128x384xbf16>, vector<16x384xf32> -> vector<16x384xf32>
    %c0_4 = arith.constant 0 : index
    %c0_5 = arith.constant 0 : index
    %5 = vector.load %arg3[%c0_4, %c0_5] : memref<1x384xf32, #tpu.memory_space<vmem>>, vector<1x384xf32>
    %6 = vector.broadcast %5 : vector<1x384xf32> to vector<16x384xf32>
    %7 = arith.addf %4, %6 : vector<16x384xf32>
    %cst_6 = arith.constant 0.000000e+00 : f32
    %8 = vector.broadcast %cst_6 : f32 to vector<16x128xf32>
    %9 = vector.extract_strided_slice %7 {offsets = [0, 0], sizes = [16, 32], strides = [1, 1]} : vector<16x384xf32> to vector<16x32xf32>
    %10 = arith.truncf %9 : vector<16x32xf32> to vector<16x32xbf16>
    %11 = vector.extract_strided_slice %7 {offsets = [0, 128], sizes = [16, 32], strides = [1, 1]} : vector<16x384xf32> to vector<16x32xf32>
    %12 = arith.truncf %11 : vector<16x32xf32> to vector<16x32xbf16>
    %13 = vector.extract_strided_slice %7 {offsets = [0, 256], sizes = [16, 32], strides = [1, 1]} : vector<16x384xf32> to vector<16x32xf32>
    %14 = arith.truncf %13 : vector<16x32xf32> to vector<16x32xbf16>
    %cst_7 = arith.constant dense<0.000000e+00> : vector<16x16xf32>
    %15 = tpu.matmul %10, %12, %cst_7 {dimension_numbers = #tpu.dot_dimension_numbers<[1], [1], [0], [0], [0, 0, 1, 0], [], []>} : vector<16x32xbf16>, vector<16x32xbf16>, vector<16x16xf32> -> vector<16x16xf32>
    %cst_8 = arith.constant dense<0xFF800000> : vector<16xf32>
    %16 = vector.multi_reduction <maximumf>, %15, %cst_8 [1] : vector<16x16xf32> to vector<16xf32>
    %17 = vector.shape_cast %16 : vector<16xf32> to vector<16x1xf32>
    %18 = vector.broadcast %17 : vector<16x1xf32> to vector<16x16xf32>
    %19 = arith.subf %15, %18 : vector<16x16xf32>
    %20 = math.exp %19 : vector<16x16xf32>
    %cst_9 = arith.constant dense<0.000000e+00> : vector<16xf32>
    %21 = vector.multi_reduction <add>, %20, %cst_9 [1] : vector<16x16xf32> to vector<16xf32>
    %22 = vector.shape_cast %21 : vector<16xf32> to vector<16x1xf32>
    %23 = tpu.reciprocal %22 {approx = true} : vector<16x1xf32> -> vector<16x1xf32>
    %24 = vector.broadcast %23 : vector<16x1xf32> to vector<16x16xf32>
    %25 = arith.mulf %20, %24 : vector<16x16xf32>
    %26 = arith.truncf %25 : vector<16x16xf32> to vector<16x16xbf16>
    %cst_10 = arith.constant dense<0.000000e+00> : vector<16x32xf32>
    %27 = tpu.matmul %26, %14, %cst_10 {dimension_numbers = #tpu.dot_dimension_numbers<[1], [0], [0], [1], [0, 0, 1, 1], [], []>} : vector<16x16xbf16>, vector<16x32xbf16>, vector<16x32xf32> -> vector<16x32xf32>
    %28 = arith.truncf %27 : vector<16x32xf32> to vector<16x32xbf16>
    %c0_11 = arith.constant 0 : index
    %c0_12 = arith.constant 0 : index
    %29 = vector.load %arg4[%c0_11, %c0_12] : memref<128x128xbf16, #tpu.memory_space<vmem>>, vector<32x128xbf16>
    %cst_13 = arith.constant dense<0.000000e+00> : vector<16x128xf32>
    %30 = tpu.matmul %28, %29, %cst_13 {dimension_numbers = #tpu.dot_dimension_numbers<[1], [0], [0], [1], [0, 0, 1, 1], [], []>} : vector<16x32xbf16>, vector<32x128xbf16>, vector<16x128xf32> -> vector<16x128xf32>
    %31 = arith.addf %8, %30 : vector<16x128xf32>
    %32 = vector.extract_strided_slice %7 {offsets = [0, 32], sizes = [16, 32], strides = [1, 1]} : vector<16x384xf32> to vector<16x32xf32>
    %33 = arith.truncf %32 : vector<16x32xf32> to vector<16x32xbf16>
    %34 = vector.extract_strided_slice %7 {offsets = [0, 160], sizes = [16, 32], strides = [1, 1]} : vector<16x384xf32> to vector<16x32xf32>
    %35 = arith.truncf %34 : vector<16x32xf32> to vector<16x32xbf16>
    %36 = vector.extract_strided_slice %7 {offsets = [0, 288], sizes = [16, 32], strides = [1, 1]} : vector<16x384xf32> to vector<16x32xf32>
    %37 = arith.truncf %36 : vector<16x32xf32> to vector<16x32xbf16>
    %cst_14 = arith.constant dense<0.000000e+00> : vector<16x16xf32>
    %38 = tpu.matmul %33, %35, %cst_14 {dimension_numbers = #tpu.dot_dimension_numbers<[1], [1], [0], [0], [0, 0, 1, 0], [], []>} : vector<16x32xbf16>, vector<16x32xbf16>, vector<16x16xf32> -> vector<16x16xf32>
    %cst_15 = arith.constant dense<0xFF800000> : vector<16xf32>
    %39 = vector.multi_reduction <maximumf>, %38, %cst_15 [1] : vector<16x16xf32> to vector<16xf32>
    %40 = vector.shape_cast %39 : vector<16xf32> to vector<16x1xf32>
    %41 = vector.broadcast %40 : vector<16x1xf32> to vector<16x16xf32>
    %42 = arith.subf %38, %41 : vector<16x16xf32>
    %43 = math.exp %42 : vector<16x16xf32>
    %cst_16 = arith.constant dense<0.000000e+00> : vector<16xf32>
    %44 = vector.multi_reduction <add>, %43, %cst_16 [1] : vector<16x16xf32> to vector<16xf32>
    %45 = vector.shape_cast %44 : vector<16xf32> to vector<16x1xf32>
    %46 = tpu.reciprocal %45 {approx = true} : vector<16x1xf32> -> vector<16x1xf32>
    %47 = vector.broadcast %46 : vector<16x1xf32> to vector<16x16xf32>
    %48 = arith.mulf %43, %47 : vector<16x16xf32>
    %49 = arith.truncf %48 : vector<16x16xf32> to vector<16x16xbf16>
    %cst_17 = arith.constant dense<0.000000e+00> : vector<16x32xf32>
    %50 = tpu.matmul %49, %37, %cst_17 {dimension_numbers = #tpu.dot_dimension_numbers<[1], [0], [0], [1], [0, 0, 1, 1], [], []>} : vector<16x16xbf16>, vector<16x32xbf16>, vector<16x32xf32> -> vector<16x32xf32>
    %51 = arith.truncf %50 : vector<16x32xf32> to vector<16x32xbf16>
    %c32 = arith.constant 32 : index
    %c0_18 = arith.constant 0 : index
    %52 = vector.load %arg4[%c32, %c0_18] : memref<128x128xbf16, #tpu.memory_space<vmem>>, vector<32x128xbf16>
    %cst_19 = arith.constant dense<0.000000e+00> : vector<16x128xf32>
    %53 = tpu.matmul %51, %52, %cst_19 {dimension_numbers = #tpu.dot_dimension_numbers<[1], [0], [0], [1], [0, 0, 1, 1], [], []>} : vector<16x32xbf16>, vector<32x128xbf16>, vector<16x128xf32> -> vector<16x128xf32>
    %54 = arith.addf %31, %53 : vector<16x128xf32>
    %55 = vector.extract_strided_slice %7 {offsets = [0, 64], sizes = [16, 32], strides = [1, 1]} : vector<16x384xf32> to vector<16x32xf32>
    %56 = arith.truncf %55 : vector<16x32xf32> to vector<16x32xbf16>
    %57 = vector.extract_strided_slice %7 {offsets = [0, 192], sizes = [16, 32], strides = [1, 1]} : vector<16x384xf32> to vector<16x32xf32>
    %58 = arith.truncf %57 : vector<16x32xf32> to vector<16x32xbf16>
    %59 = vector.extract_strided_slice %7 {offsets = [0, 320], sizes = [16, 32], strides = [1, 1]} : vector<16x384xf32> to vector<16x32xf32>
    %60 = arith.truncf %59 : vector<16x32xf32> to vector<16x32xbf16>
    %cst_20 = arith.constant dense<0.000000e+00> : vector<16x16xf32>
    %61 = tpu.matmul %56, %58, %cst_20 {dimension_numbers = #tpu.dot_dimension_numbers<[1], [1], [0], [0], [0, 0, 1, 0], [], []>} : vector<16x32xbf16>, vector<16x32xbf16>, vector<16x16xf32> -> vector<16x16xf32>
    %cst_21 = arith.constant dense<0xFF800000> : vector<16xf32>
    %62 = vector.multi_reduction <maximumf>, %61, %cst_21 [1] : vector<16x16xf32> to vector<16xf32>
    %63 = vector.shape_cast %62 : vector<16xf32> to vector<16x1xf32>
    %64 = vector.broadcast %63 : vector<16x1xf32> to vector<16x16xf32>
    %65 = arith.subf %61, %64 : vector<16x16xf32>
    %66 = math.exp %65 : vector<16x16xf32>
    %cst_22 = arith.constant dense<0.000000e+00> : vector<16xf32>
    %67 = vector.multi_reduction <add>, %66, %cst_22 [1] : vector<16x16xf32> to vector<16xf32>
    %68 = vector.shape_cast %67 : vector<16xf32> to vector<16x1xf32>
    %69 = tpu.reciprocal %68 {approx = true} : vector<16x1xf32> -> vector<16x1xf32>
    %70 = vector.broadcast %69 : vector<16x1xf32> to vector<16x16xf32>
    %71 = arith.mulf %66, %70 : vector<16x16xf32>
    %72 = arith.truncf %71 : vector<16x16xf32> to vector<16x16xbf16>
    %cst_23 = arith.constant dense<0.000000e+00> : vector<16x32xf32>
    %73 = tpu.matmul %72, %60, %cst_23 {dimension_numbers = #tpu.dot_dimension_numbers<[1], [0], [0], [1], [0, 0, 1, 1], [], []>} : vector<16x16xbf16>, vector<16x32xbf16>, vector<16x32xf32> -> vector<16x32xf32>
    %74 = arith.truncf %73 : vector<16x32xf32> to vector<16x32xbf16>
    %c64 = arith.constant 64 : index
    %c0_24 = arith.constant 0 : index
    %75 = vector.load %arg4[%c64, %c0_24] : memref<128x128xbf16, #tpu.memory_space<vmem>>, vector<32x128xbf16>
    %cst_25 = arith.constant dense<0.000000e+00> : vector<16x128xf32>
    %76 = tpu.matmul %74, %75, %cst_25 {dimension_numbers = #tpu.dot_dimension_numbers<[1], [0], [0], [1], [0, 0, 1, 1], [], []>} : vector<16x32xbf16>, vector<32x128xbf16>, vector<16x128xf32> -> vector<16x128xf32>
    %77 = arith.addf %54, %76 : vector<16x128xf32>
    %78 = vector.extract_strided_slice %7 {offsets = [0, 96], sizes = [16, 32], strides = [1, 1]} : vector<16x384xf32> to vector<16x32xf32>
    %79 = arith.truncf %78 : vector<16x32xf32> to vector<16x32xbf16>
    %80 = vector.extract_strided_slice %7 {offsets = [0, 224], sizes = [16, 32], strides = [1, 1]} : vector<16x384xf32> to vector<16x32xf32>
    %81 = arith.truncf %80 : vector<16x32xf32> to vector<16x32xbf16>
    %82 = vector.extract_strided_slice %7 {offsets = [0, 352], sizes = [16, 32], strides = [1, 1]} : vector<16x384xf32> to vector<16x32xf32>
    %83 = arith.truncf %82 : vector<16x32xf32> to vector<16x32xbf16>
    %cst_26 = arith.constant dense<0.000000e+00> : vector<16x16xf32>
    %84 = tpu.matmul %79, %81, %cst_26 {dimension_numbers = #tpu.dot_dimension_numbers<[1], [1], [0], [0], [0, 0, 1, 0], [], []>} : vector<16x32xbf16>, vector<16x32xbf16>, vector<16x16xf32> -> vector<16x16xf32>
    %cst_27 = arith.constant dense<0xFF800000> : vector<16xf32>
    %85 = vector.multi_reduction <maximumf>, %84, %cst_27 [1] : vector<16x16xf32> to vector<16xf32>
    %86 = vector.shape_cast %85 : vector<16xf32> to vector<16x1xf32>
    %87 = vector.broadcast %86 : vector<16x1xf32> to vector<16x16xf32>
    %88 = arith.subf %84, %87 : vector<16x16xf32>
    %89 = math.exp %88 : vector<16x16xf32>
    %cst_28 = arith.constant dense<0.000000e+00> : vector<16xf32>
    %90 = vector.multi_reduction <add>, %89, %cst_28 [1] : vector<16x16xf32> to vector<16xf32>
    %91 = vector.shape_cast %90 : vector<16xf32> to vector<16x1xf32>
    %92 = tpu.reciprocal %91 {approx = true} : vector<16x1xf32> -> vector<16x1xf32>
    %93 = vector.broadcast %92 : vector<16x1xf32> to vector<16x16xf32>
    %94 = arith.mulf %89, %93 : vector<16x16xf32>
    %95 = arith.truncf %94 : vector<16x16xf32> to vector<16x16xbf16>
    %cst_29 = arith.constant dense<0.000000e+00> : vector<16x32xf32>
    %96 = tpu.matmul %95, %83, %cst_29 {dimension_numbers = #tpu.dot_dimension_numbers<[1], [0], [0], [1], [0, 0, 1, 1], [], []>} : vector<16x16xbf16>, vector<16x32xbf16>, vector<16x32xf32> -> vector<16x32xf32>
    %97 = arith.truncf %96 : vector<16x32xf32> to vector<16x32xbf16>
    %c96 = arith.constant 96 : index
    %c0_30 = arith.constant 0 : index
    %98 = vector.load %arg4[%c96, %c0_30] : memref<128x128xbf16, #tpu.memory_space<vmem>>, vector<32x128xbf16>
    %cst_31 = arith.constant dense<0.000000e+00> : vector<16x128xf32>
    %99 = tpu.matmul %97, %98, %cst_31 {dimension_numbers = #tpu.dot_dimension_numbers<[1], [0], [0], [1], [0, 0, 1, 1], [], []>} : vector<16x32xbf16>, vector<32x128xbf16>, vector<16x128xf32> -> vector<16x128xf32>
    %100 = arith.addf %77, %99 : vector<16x128xf32>
    %c0_32 = arith.constant 0 : index
    %c0_33 = arith.constant 0 : index
    %101 = vector.load %arg5[%c0_32, %c0_33] : memref<1x128xf32, #tpu.memory_space<vmem>>, vector<1x128xf32>
    %102 = vector.broadcast %101 : vector<1x128xf32> to vector<16x128xf32>
    %103 = arith.addf %100, %102 : vector<16x128xf32>
    %c0_34 = arith.constant 0 : index
    %c0_35 = arith.constant 0 : index
    %c0_36 = arith.constant 0 : index
    %104 = vector.load %arg6[%c0_34, %c0_35, %c0_36] : memref<1x16x128xf32, #tpu.memory_space<vmem>>, vector<1x16x128xf32>
    %105 = vector.shape_cast %104 : vector<1x16x128xf32> to vector<16x128xf32>
    %106 = vector.shape_cast %103 : vector<16x128xf32> to vector<1x16x128xf32>
    tpu.vector_store %arg6[%c0_34, %c0_35, %c0_36], %106 {strides = array<i32>} : memref<1x16x128xf32, #tpu.memory_space<vmem>>, vector<1x16x128xf32>,
    return
  }
  func.func @transform_0(%arg0: i32) -> (i32, i32, i32) {
    %c0_i32 = arith.constant 0 : i32
    %c0_i32_0 = arith.constant 0 : i32
    %c0_i32_1 = arith.constant 0 : i32
    return %arg0, %c0_i32, %c0_i32_0 : i32, i32, i32
  }
  func.func @transform_1(%arg0: i32) -> (i32, i32) {
    %c0_i32 = arith.constant 0 : i32
    %c0_i32_0 = arith.constant 0 : i32
    %c0_i32_1 = arith.constant 0 : i32
    return %c0_i32, %c0_i32_0 : i32, i32
  }
  func.func @transform_2(%arg0: i32) -> (i32, i32) {
    %c0_i32 = arith.constant 0 : i32
    %c0_i32_0 = arith.constant 0 : i32
    %c0_i32_1 = arith.constant 0 : i32
    return %c0_i32, %c0_i32_0 : i32, i32
  }
  func.func @transform_3(%arg0: i32) -> (i32, i32) {
    %c0_i32 = arith.constant 0 : i32
    %c0_i32_0 = arith.constant 0 : i32
    %c0_i32_1 = arith.constant 0 : i32
    return %c0_i32, %c0_i32_0 : i32, i32
  }
  func.func @transform_4(%arg0: i32) -> (i32, i32) {
    %c0_i32 = arith.constant 0 : i32
    %c0_i32_0 = arith.constant 0 : i32
    %c0_i32_1 = arith.constant 0 : i32
    return %c0_i32, %c0_i32_0 : i32, i32
  }
  func.func @transform_5(%arg0: i32) -> (i32, i32, i32) {
    %c0_i32 = arith.constant 0 : i32
    %c0_i32_0 = arith.constant 0 : i32
    %c0_i32_1 = arith.constant 0 : i32
    return %arg0, %c0_i32, %c0_i32_0 : i32, i32, i32
  }
}

</mosaic_0001>

<llo_original>
// kernel: attention_forward.1
$region0: #{attention_forward.1}
  #allocation0 [shape = 'u32[]', space=smem, size = 0x4, offset = 0x4, fixed_abs, tag = 'smem constant byte address 0x4 - core index']
  #allocation1 [shape = 'u32[144,128]{1,0:T(1,128)}', space=vmem, size = 0x12000, scoped, tag = 'internal scratch']
  %s0 = inlined_call_operand.hbm [shape: f32[2,16,128], index: 0, kind: input, shape index: {}]
  %s1 = inlined_call_operand.hbm [shape: bf16[128,384], index: 1, kind: input, shape index: {}]
  %s2 = inlined_call_operand.hbm [shape: f32[1,384], index: 2, kind: input, shape index: {}]
  %s3 = inlined_call_operand.hbm [shape: bf16[128,128], index: 3, kind: input, shape index: {}]
  %s4 = inlined_call_operand.vmem [shape: f32[1,128], index: 4, kind: input, shape index: {}]
  %s5 = inlined_call_operand.hbm [shape: f32[2,16,128], index: 5, kind: output, shape index: {}]
  %s6 = sld [smem:[#allocation0]]
  $region69: #{attention_forward.1} parent=0
    _
  %s8 = ssub.s32 1, %s6
  %s9 = scalar_select 0, %s8, %s6
  $region1: #{attention_forward.1} parent=0
    #allocation2 [shape = 'u8[16384]{0}', space=vmem, size = 0x4000, scoped, tag = 'input window, operand 0']
    #allocation3 [shape = 's32[2]{0}', space=sflag, size = 0x8, scoped, tag = 'scoped memory for attention_forward.1']
    #allocation4 [shape = 's32[2]{0}', space=sflag, size = 0x8, scoped, tag = 'scoped memory for attention_forward.1']
    #allocation5 [shape = 'u8[98304]{0}', space=vmem, size = 0x18000, scoped, tag = 'input window, operand 1, single buffered']
    #allocation6 [shape = 's32[1]{0}', space=sflag, size = 0x4, scoped, tag = 'scoped memory for attention_forward.1']
    #allocation7 [shape = 'u8[1536]{0}', space=vmem, size = 0x800, scoped, tag = 'input window, operand 2, single buffered']
    #allocation8 [shape = 'u8[32768]{0}', space=vmem, size = 0x8000, scoped, tag = 'input window, operand 3, single buffered']
    #allocation9 [shape = 's32[1]{0}', space=sflag, size = 0x4, scoped, tag = 'scoped memory for attention_forward.1']
    #allocation10 [shape = 'u8[16384]{0}', space=vmem, size = 0x4000, scoped, tag = 'output window, operand 0']
    %10 = vsyncpa [#allocation3], 0
    %s11 = scalar_lea.sflag [#allocation3], 1
    %12 = vsyncpa %s11, 0
    %13 = vsyncpa [#allocation6], 0
    %14 = vsyncpa [#allocation9], 0
    %15 = vsyncpa [#allocation4], 0
    %s16 = scalar_lea.sflag [#allocation4], 1
    %17 = vsyncpa %s16, 0
    loop: start=0, step=1, limit=4
    $region2: #{attention_forward.1} parent=1 // loop_pre_header
      _
    $region3: #{attention_forward.1} parent=1 // loop_header
      %s19 = sphi 0, %s23
      %p20 = scmp.ge.s32.totalorder %s19, 4
      %s29 = sphi 0, %s31
      %s32 = sphi 0, %s29
      %s33 = sphi 0, %s32
      %s49 = sphi 0, %s33
      %s53 = sphi 0, %s53
      %s55 = sphi 0, %s53
      %s56 = sphi 0, %s55
      %s70 = sphi 0, %s56
      %s74 = sphi 0, %s74
      %s76 = sphi 0, %s74
      %s77 = sphi 0, %s76
      %s91 = sphi 0, %s77
      %s95 = sphi 0, %s95
      %s97 = sphi 0, %s95
      %s98 = sphi 0, %s97
      %s112 = sphi 0, %s98
      %s116 = sphi 0, %s116
      %s118 = sphi 0, %s116
      %s119 = sphi 0, %s118
      %s133 = sphi 0, %s119
      %s139 = sphi 0, %s141
      %s142 = sphi 0, %s139
      %s143 = sphi 0, %s142
      %s159 = sphi 0, %s143
    $region4: #{attention_forward.1} parent=1 // loop_header_branch
      %22 = sbr.rel (%p20) target = $region8
    $region5: #{attention_forward.1} parent=1 // loop_body
      %s24 = ssub.s32 %s19, 1
      %s25 = ssub.s32 %s19, 2
      %s26 = sadd.s32 %s19, 1
      %s27 = ssub.s32 %s19, %s26
      %p28 = scmp.eq.s32.totalorder %s27, 0
      %s30 = sadd.s32 %s29, 1
      %s31 = scalar_select %p28, %s29, %s30
      %p34 = pneg %p28
      %p35 = scmp.eq.s32.totalorder %s19, 1
      %p36 = por %p34, %p35
      %p37 = scmp.ne.s32.totalorder %s29, %s32
      %p38 = scmp.eq.s32.totalorder %s19, 0
      %p39 = por %p37, %p38
      %p40 = scmp.ne.s32.totalorder %s29, %s32
      %p41 = scmp.eq.s32.totalorder %s24, 1
      %p42 = por %p40, %p41
      %p43 = scmp.ne.s32.totalorder %s32, %s33
      %p44 = scmp.eq.s32.totalorder %s24, 0
      %p45 = por %p43, %p44
      %p46 = scmp.ne.s32.totalorder %s32, %s33
      %p47 = scmp.eq.s32.totalorder %s25, 1
      %p48 = por %p46, %p47
      %p50 = scmp.ne.s32.totalorder %s33, %s49
      %p51 = scmp.eq.s32.totalorder %s25, 0
      %p52 = por %p50, %p51
      %s54 = sadd.s32 %s53, 1
      %p57 = scmp.eq.s32.totalorder %s19, 1
      %p58 = scmp.ne.s32.totalorder %s53, %s55
      %p59 = scmp.eq.s32.totalorder %s19, 0
      %p60 = por %p58, %p59
      %p61 = scmp.ne.s32.totalorder %s53, %s55
      %p62 = scmp.eq.s32.totalorder %s24, 1
      %p63 = por %p61, %p62
      %p64 = scmp.ne.s32.totalorder %s55, %s56
      %p65 = scmp.eq.s32.totalorder %s24, 0
      %p66 = por %p64, %p65
      %p67 = scmp.ne.s32.totalorder %s55, %s56
      %p68 = scmp.eq.s32.totalorder %s25, 1
      %p69 = por %p67, %p68
      %p71 = scmp.ne.s32.totalorder %s56, %s70
      %p72 = scmp.eq.s32.totalorder %s25, 0
      %p73 = por %p71, %p72
      %s75 = sadd.s32 %s74, 1
      %p78 = scmp.eq.s32.totalorder %s19, 1
      %p79 = scmp.ne.s32.totalorder %s74, %s76
      %p80 = scmp.eq.s32.totalorder %s19, 0
      %p81 = por %p79, %p80
      %p82 = scmp.ne.s32.totalorder %s74, %s76
      %p83 = scmp.eq.s32.totalorder %s24, 1
      %p84 = por %p82, %p83
      %p85 = scmp.ne.s32.totalorder %s76, %s77
      %p86 = scmp.eq.s32.totalorder %s24, 0
      %p87 = por %p85, %p86
      %p88 = scmp.ne.s32.totalorder %s76, %s77
      %p89 = scmp.eq.s32.totalorder %s25, 1
      %p90 = por %p88, %p89
      %p92 = scmp.ne.s32.totalorder %s77, %s91
      %p93 = scmp.eq.s32.totalorder %s25, 0
      %p94 = por %p92, %p93
      %s96 = sadd.s32 %s95, 1
      %p99 = scmp.eq.s32.totalorder %s19, 1
      %p100 = scmp.ne.s32.totalorder %s95, %s97
      %p101 = scmp.eq.s32.totalorder %s19, 0
      %p102 = por %p100, %p101
      %p103 = scmp.ne.s32.totalorder %s95, %s97
      %p104 = scmp.eq.s32.totalorder %s24, 1
      %p105 = por %p103, %p104
      %p106 = scmp.ne.s32.totalorder %s97, %s98
      %p107 = scmp.eq.s32.totalorder %s24, 0
      %p108 = por %p106, %p107
      %p109 = scmp.ne.s32.totalorder %s97, %s98
      %p110 = scmp.eq.s32.totalorder %s25, 1
      %p111 = por %p109, %p110
      %p113 = scmp.ne.s32.totalorder %s98, %s112
      %p114 = scmp.eq.s32.totalorder %s25, 0
      %p115 = por %p113, %p114
      %s117 = sadd.s32 %s116, 1
      %p120 = scmp.eq.s32.totalorder %s19, 1
      %p121 = scmp.ne.s32.totalorder %s116, %s118
      %p122 = scmp.eq.s32.totalorder %s19, 0
      %p123 = por %p121, %p122
      %p124 = scmp.ne.s32.totalorder %s116, %s118
      %p125 = scmp.eq.s32.totalorder %s24, 1
      %p126 = por %p124, %p125
      %p127 = scmp.ne.s32.totalorder %s118, %s119
      %p128 = scmp.eq.s32.totalorder %s24, 0
      %p129 = por %p127, %p128
      %p130 = scmp.ne.s32.totalorder %s118, %s119
      %p131 = scmp.eq.s32.totalorder %s25, 1
      %p132 = por %p130, %p131
      %p134 = scmp.ne.s32.totalorder %s119, %s133
      %p135 = scmp.eq.s32.totalorder %s25, 0
      %p136 = por %p134, %p135
      %s137 = ssub.s32 %s19, %s26
      %p138 = scmp.eq.s32.totalorder %s137, 0
      %s140 = sadd.s32 %s139, 1
      %s141 = scalar_select %p138, %s139, %s140
      %p144 = pneg %p138
      %p145 = scmp.eq.s32.totalorder %s19, 1
      %p146 = por %p144, %p145
      %p147 = scmp.ne.s32.totalorder %s139, %s142
      %p148 = scmp.eq.s32.totalorder %s19, 0
      %p149 = por %p147, %p148
      %p150 = scmp.ne.s32.totalorder %s139, %s142
      %p151 = scmp.eq.s32.totalorder %s24, 1
      %p152 = por %p150, %p151
      %p153 = scmp.ne.s32.totalorder %s142, %s143
      %p154 = scmp.eq.s32.totalorder %s24, 0
      %p155 = por %p153, %p154
      %p156 = scmp.ne.s32.totalorder %s142, %s143
      %p157 = scmp.eq.s32.totalorder %s25, 1
      %p158 = por %p156, %p157
      %p160 = scmp.ne.s32.totalorder %s143, %s159
      %p161 = scmp.eq.s32.totalorder %s25, 0
      %p162 = por %p160, %p161
      %p163 = scmp.le.s32.totalorder 1, %s19
      %p164 = scmp.lt.s32.totalorder %s19, 3
      %p165 = pnand %p163, %p164
      %p166 = pneg %p165
      // Predicated region
      $region9: #{attention_forward.1} parent=5 // pred_check
        _
      $region10: #{attention_forward.1} parent=5 // pred_check_branch
        %168 = sbr.rel (%p165) target = $region12
      $region11: #{attention_forward.1} parent=5 // pred_region
        %s169 = ssub.s32 %s19, 1
        // Predicated region
        $region13: #{attention_forward.1} parent=11 // pred_check
          %p170 = pneg %p66
        $region14: #{attention_forward.1} parent=11 // pred_check_branch
          %172 = sbr.rel (%p170) target = $region16
        $region15: #{attention_forward.1} parent=11 // pred_region
          %s174 = ssub.s32 3072, 3072
          %175 = vsyncadd [#allocation6], %s174
          %s176 = sshll.u32 [#allocation5], 4
          %s177 = int_to_ptr.vmem [resolvable:$true] %s176
          %182 = dma.hbm_to_vmem [thread:$0]  %s1, 3072, %s177, [#allocation6], 192, 192, 12
        $region16: #{attention_forward.1} parent=11 // pred_fallthru
          _
        // Predicated region
        $region17: #{attention_forward.1} parent=11 // pred_check
          %p183 = pneg %p87
        $region18: #{attention_forward.1} parent=11 // pred_check_branch
          %185 = sbr.rel (%p183) target = $region20
        $region19: #{attention_forward.1} parent=11 // pred_region
          %s187 = ssub.s32 48, 48
          %188 = vsyncadd [#allocation6], %s187
          %s190 = sshll.u32 [#allocation7], 4
          %s191 = int_to_ptr.vmem [resolvable:$true] %s190
          %193 = dma.hbm_to_vmem [thread:$0]  %s2, 48, %s191, [#allocation6]
        $region20: #{attention_forward.1} parent=11 // pred_fallthru
          _
        // Predicated region
        $region21: #{attention_forward.1} parent=11 // pred_check
          %p194 = pneg %p108
        $region22: #{attention_forward.1} parent=11 // pred_check_branch
          %196 = sbr.rel (%p194) target = $region24
        $region23: #{attention_forward.1} parent=11 // pred_region
          %s198 = ssub.s32 1024, 1024
          %199 = vsyncadd [#allocation9], %s198
          %s200 = sshll.u32 [#allocation8], 4
          %s201 = int_to_ptr.vmem [resolvable:$true] %s200
          %206 = dma.hbm_to_vmem [thread:$0]  %s3, 1024, %s201, [#allocation9], 64, 64, 4
        $region24: #{attention_forward.1} parent=11 // pred_fallthru
          _
        // Predicated region
        $region25: #{attention_forward.1} parent=11 // pred_check
          %p207 = pneg %p129
        $region26: #{attention_forward.1} parent=11 // pred_check_branch
          %209 = sbr.rel (%p207) target = $region28
        $region27: #{attention_forward.1} parent=11 // pred_region
          _
        $region28: #{attention_forward.1} parent=11 // pred_fallthru
          _
      $region12: #{attention_forward.1} parent=5 // pred_fallthru
        _
      %p210 = scmp.lt.s32.totalorder %s19, 2
      // Predicated region
      $region29: #{attention_forward.1} parent=5 // pred_check
        %p211 = pneg %p210
      $region30: #{attention_forward.1} parent=5 // pred_check_branch
        %213 = sbr.rel (%p211) target = $region32
      $region31: #{attention_forward.1} parent=5 // pred_region
        // Predicated region
        $region33: #{attention_forward.1} parent=31 // pred_check
          %p214 = pneg %p39
        $region34: #{attention_forward.1} parent=31 // pred_check_branch
          %216 = sbr.rel (%p214) target = $region36
        $region35: #{attention_forward.1} parent=31 // pred_region
          %s217 = sand.u32 %s29, 1
          %s218 = scalar_lea.sflag [#allocation3], %s217
          %s219 = sand.u32 %s29, 1
          %s220 = smul.addr %s219, 16
          %s221 = scalar_lea.vmem [#allocation2], %s220
          %s223 = ssub.s32 256, 256
          %224 = vsyncadd %s218, %s223
          %s225 = smul.addr %s19, 2
          %s226 = smul.addr %s225, 128
          %s227 = scalar_lea.hbm %s0, %s226
          %s228 = sshll.u32 %s221, 4
          %s229 = int_to_ptr.vmem [resolvable:$true] %s228
          %234 = dma.hbm_to_vmem [thread:$0]  %s227, 256, %s229, %s218, 128, 128, 8
        $region36: #{attention_forward.1} parent=31 // pred_fallthru
          _
      $region32: #{attention_forward.1} parent=5 // pred_fallthru
        _
      %p235 = scmp.le.s32.totalorder 1, %s19
      %p236 = scmp.lt.s32.totalorder %s19, 3
      %p237 = pnand %p235, %p236
      %p238 = pneg %p237
      // Predicated region
      $region37: #{attention_forward.1} parent=5 // pred_check
        _
      $region38: #{attention_forward.1} parent=5 // pred_check_branch
        %240 = sbr.rel (%p237) target = $region40
      $region39: #{attention_forward.1} parent=5 // pred_region
        %s241 = ssub.s32 %s19, 1
        %s242 = sand.u32 %s32, 1
        %s243 = scalar_lea.sflag [#allocation3], %s242
        %s244 = sand.u32 %s32, 1
        %s245 = smul.addr %s244, 16
        %s246 = scalar_lea.vmem [#allocation2], %s245
        // Predicated region
        $region41: #{attention_forward.1} parent=39 // pred_check
          %p247 = pneg %p45
        $region42: #{attention_forward.1} parent=39 // pred_check_branch
          %249 = sbr.rel (%p247) target = $region44
        $region43: #{attention_forward.1} parent=39 // pred_region
          %250 = dma.done %s243, 256
        $region44: #{attention_forward.1} parent=39 // pred_fallthru
          _
        // Predicated region
        $region45: #{attention_forward.1} parent=39 // pred_check
          %p251 = pneg %p66
        $region46: #{attention_forward.1} parent=39 // pred_check_branch
          %253 = sbr.rel (%p251) target = $region48
        $region47: #{attention_forward.1} parent=39 // pred_region
          %254 = dma.done [#allocation6], 3072
        $region48: #{attention_forward.1} parent=39 // pred_fallthru
          _
        // Predicated region
        $region49: #{attention_forward.1} parent=39 // pred_check
          %p255 = pneg %p87
        $region50: #{attention_forward.1} parent=39 // pred_check_branch
          %257 = sbr.rel (%p255) target = $region52
        $region51: #{attention_forward.1} parent=39 // pred_region
          %258 = dma.done [#allocation6], 48
        $region52: #{attention_forward.1} parent=39 // pred_fallthru
          _
        // Predicated region
        $region53: #{attention_forward.1} parent=39 // pred_check
          %p259 = pneg %p108
        $region54: #{attention_forward.1} parent=39 // pred_check_branch
          %261 = sbr.rel (%p259) target = $region56
        $region55: #{attention_forward.1} parent=39 // pred_region
          %262 = dma.done [#allocation9], 1024
        $region56: #{attention_forward.1} parent=39 // pred_fallthru
          _
        %s263 = sand.u32 %s32, 1
        %s264 = scalar_lea.sflag [#allocation3], %s263
        %s265 = sand.u32 %s32, 1
        %s266 = smul.addr %s265, 16
        %s267 = scalar_lea.vmem [#allocation2], %s266
        %p268 = pneg %p45
        %p269 = pneg %p42
        %p270 = pneg %p66
        %p271 = pneg %p63
        %p272 = pneg %p87
        %p273 = pneg %p84
        %p274 = pneg %p108
        %p275 = pneg %p105
        %p276 = pneg %p129
        %p277 = pneg %p126
        %p278 = pneg %p155
        %p279 = pneg %p152
        %s280 = sand.u32 %s142, 1
        %s281 = scalar_lea.sflag [#allocation4], %s280
        %s282 = sand.u32 %s142, 1
        %s283 = smul.addr %s282, 16
        %s284 = scalar_lea.vmem [#allocation10], %s283
        %v286 = vld [vmem:[%s246] sm:$0xff]
        %v287 = vld [vmem:[%s246 + $0x8] sm:$0xff]
        %v288 = vpack.c.bf16 %v287, %v286
        %v289 = vld [vmem:[#allocation5] sm:$0xff]
        %v290 = vld [vmem:[#allocation5 + $0x8] sm:$0xf]
        %v291 = vld [vmem:[#allocation5 + $0xc] sm:$0xff]
        %v292 = vld [vmem:[#allocation5 + $0x14] sm:$0xf]
        %v293 = vld [vmem:[#allocation5 + $0x18] sm:$0xff]
        %v294 = vld [vmem:[#allocation5 + $0x20] sm:$0xf]
        %v295 = vld [vmem:[#allocation5 + $0x24] sm:$0xff]
        %v296 = vld [vmem:[#allocation5 + $0x2c] sm:$0xf]
        %v297 = vld [vmem:[#allocation5 + $0x30] sm:$0xff]
        %v298 = vld [vmem:[#allocation5 + $0x38] sm:$0xf]
        %v299 = vld [vmem:[#allocation5 + $0x3c] sm:$0xff]
        %v300 = vld [vmem:[#allocation5 + $0x44] sm:$0xf]
        %v301 = vld [vmem:[#allocation5 + $0x48] sm:$0xff]
        %v302 = vld [vmem:[#allocation5 + $0x50] sm:$0xf]
        %v303 = vld [vmem:[#allocation5 + $0x54] sm:$0xff]
        %v304 = vld [vmem:[#allocation5 + $0x5c] sm:$0xf]
        %v305 = vld [vmem:[#allocation5 + $0x60] sm:$0xff]
        %v306 = vld [vmem:[#allocation5 + $0x68] sm:$0xf]
        %v307 = vld [vmem:[#allocation5 + $0x6c] sm:$0xff]
        %v308 = vld [vmem:[#allocation5 + $0x74] sm:$0xf]
        %v309 = vld [vmem:[#allocation5 + $0x78] sm:$0xff]
        %v310 = vld [vmem:[#allocation5 + $0x80] sm:$0xf]
        %v311 = vld [vmem:[#allocation5 + $0x84] sm:$0xff]
        %v312 = vld [vmem:[#allocation5 + $0x8c] sm:$0xf]
        %v313 = vld [vmem:[#allocation5 + $0x90] sm:$0xff]
        %v314 = vld [vmem:[#allocation5 + $0x98] sm:$0xf]
        %v315 = vld [vmem:[#allocation5 + $0x9c] sm:$0xff]
        %v316 = vld [vmem:[#allocation5 + $0xa4] sm:$0xf]
        %v317 = vld [vmem:[#allocation5 + $0xa8] sm:$0xff]
        %v318 = vld [vmem:[#allocation5 + $0xb0] sm:$0xf]
        %v319 = vld [vmem:[#allocation5 + $0xb4] sm:$0xff]
        %v320 = vld [vmem:[#allocation5 + $0xbc] sm:$0xf]
        %v321 = vld [vmem:[#allocation7] sm:$0x7]
        %v323 = vlaneseq
        %v324 = vshrl.u32 %v323, 7
        %v325 = vsub.s32 0, %v324
        %v326 = vrot.slane %v321, %v325
        %v327 = vlaneseq
        %v328 = vshrl.u32 %v327, 7
        %v329 = vsub.s32 1, %v328
        %v330 = vrot.slane %v321, %v329
        %v331 = vlaneseq
        %v332 = vshrl.u32 %v331, 7
        %v333 = vsub.s32 2, %v332
        %v334 = vrot.slane %v321, %v333
        %v370 = vunpack.c.l.b16 %v289
        %v371 = vunpack.c.h.b16 %v289
        %v372 = vunpack.c.l.b16 %v290
        %v373 = vunpack.c.l.b16 %v291
        %v374 = vunpack.c.h.b16 %v291
        %v375 = vunpack.c.l.b16 %v292
        %v376 = vunpack.c.l.b16 %v293
        %v377 = vunpack.c.h.b16 %v293
        %v378 = vunpack.c.l.b16 %v294
        %v379 = vunpack.c.l.b16 %v295
        %v380 = vunpack.c.h.b16 %v295
        %v381 = vunpack.c.l.b16 %v296
        %v382 = vunpack.c.l.b16 %v297
        %v383 = vunpack.c.h.b16 %v297
        %v384 = vunpack.c.l.b16 %v298
        %v385 = vunpack.c.l.b16 %v299
        %v386 = vunpack.c.h.b16 %v299
        %v387 = vunpack.c.l.b16 %v300
        %v388 = vunpack.c.l.b16 %v301
        %v389 = vunpack.c.h.b16 %v301
        %v390 = vunpack.c.l.b16 %v302
        %v391 = vunpack.c.l.b16 %v303
        %v392 = vunpack.c.h.b16 %v303
        %v393 = vunpack.c.l.b16 %v304
        %v394 = vunpack.c.l.b16 %v305
        %v395 = vunpack.c.h.b16 %v305
        %v396 = vunpack.c.l.b16 %v306
        %v397 = vunpack.c.l.b16 %v307
        %v398 = vunpack.c.h.b16 %v307
        %v399 = vunpack.c.l.b16 %v308
        %v400 = vunpack.c.l.b16 %v309
        %v401 = vunpack.c.h.b16 %v309
        %v402 = vunpack.c.l.b16 %v310
        %v403 = vunpack.c.l.b16 %v311
        %v404 = vunpack.c.h.b16 %v311
        %v405 = vunpack.c.l.b16 %v312
        %v406 = vunpack.c.l.b16 %v313
        %v407 = vunpack.c.h.b16 %v313
        %v408 = vunpack.c.l.b16 %v314
        %v409 = vunpack.c.l.b16 %v315
        %v410 = vunpack.c.h.b16 %v315
        %v411 = vunpack.c.l.b16 %v316
        %v412 = vunpack.c.l.b16 %v317
        %v413 = vunpack.c.h.b16 %v317
        %v414 = vunpack.c.l.b16 %v318
        %v415 = vunpack.c.l.b16 %v319
        %v416 = vunpack.c.h.b16 %v319
        %v417 = vunpack.c.l.b16 %v320
        %v418 = vpack.c.b16 %v373, %v370
        %v419 = vpack.c.b16 %v374, %v371
        %v420 = vpack.c.b16 %v375, %v372
        %v421 = vpack.c.b16 %v379, %v376
        %v422 = vpack.c.b16 %v380, %v377
        %v423 = vpack.c.b16 %v381, %v378
        %v424 = vpack.c.b16 %v385, %v382
        %v425 = vpack.c.b16 %v386, %v383
        %v426 = vpack.c.b16 %v387, %v384
        %v427 = vpack.c.b16 %v391, %v388
        %v428 = vpack.c.b16 %v392, %v389
        %v429 = vpack.c.b16 %v393, %v390
        %v430 = vpack.c.b16 %v397, %v394
        %v431 = vpack.c.b16 %v398, %v395
        %v432 = vpack.c.b16 %v399, %v396
        %v433 = vpack.c.b16 %v403, %v400
        %v434 = vpack.c.b16 %v404, %v401
        %v435 = vpack.c.b16 %v405, %v402
        %v436 = vpack.c.b16 %v409, %v406
        %v437 = vpack.c.b16 %v410, %v407
        %v438 = vpack.c.b16 %v411, %v408
        %v439 = vpack.c.b16 %v415, %v412
        %v440 = vpack.c.b16 %v416, %v413
        %v441 = vpack.c.b16 %v417, %v414
        %466 = vmatprep.subr.bf16.mxu0 %v440
        %467 = vmatpush1.bf16.msra.mxu0 %v439
        %468 = vmatprep.subr.bf16.mxu0 %v437
        %469 = vmatpush1.bf16.msra.mxu0 %v436
        %470 = vmatprep.subr.bf16.mxu0 %v434
        %471 = vmatpush1.bf16.msra.mxu0 %v433
        %472 = vmatprep.subr.bf16.mxu0 %v431
        %473 = vmatpush1.bf16.msra.mxu0 %v430
        %474 = vmatprep.subr.bf16.mxu0 %v428
        %475 = vmatpush1.bf16.msra.mxu0 %v427
        %476 = vmatprep.subr.bf16.mxu0 %v425
        %477 = vmatpush1.bf16.msra.mxu0 %v424
        %478 = vmatprep.subr.bf16.mxu0 %v422
        %479 = vmatpush1.bf16.msra.mxu0 %v421
        %480 = vmatprep.subr.bf16.mxu0 %v419
        %481 = vmatpush1.bf16.msra.mxu0 %v418
        %482 = vmatprep.subr.bf16.mxu0 0
        %483 = vmatpush2.bf16.msra.mxu0 0
        %484 = vmatprep.subr.bf16.mxu0 0
        %485 = vmatpush2.bf16.msra.mxu0 0
        %486 = vmatprep.subr.bf16.mxu0 0
        %487 = vmatpush2.bf16.msra.mxu0 0
        %488 = vmatprep.subr.bf16.mxu0 0
        %489 = vmatpush2.bf16.msra.mxu0 0
        %490 = vmatprep.subr.bf16.mxu0 0
        %491 = vmatpush2.bf16.msra.mxu0 0
        %492 = vmatprep.subr.bf16.mxu0 0
        %493 = vmatpush2.bf16.msra.mxu0 0
        %494 = vmatprep.subr.bf16.mxu0 0
        %495 = vmatpush2.bf16.msra.mxu0 0
        %496 = vmatprep.subr.bf16.mxu0 0
        %497 = vmatpush2.bf16.msra.mxu0 0
        %498 = vmatprep.mubr.bf16.mxu0 0
        %499 = vmatmul.mubr.bf16.gmra.mxu0 %v288
        %v500 = vpop.f32.mrf.mxu0
        %v501 = vadd.f32 %v326, %v500
        %v502 = vpop.f32.mrf.mxu0
        %v503 = vadd.f32 %v330, %v502
        %v504 = vpop.f32.mrf.mxu0
        %v505 = vadd.f32 %v326, %v504
        %v506 = vpop.f32.mrf.mxu0
        %v507 = vadd.f32 %v330, %v506
        %508 = vdwg.mxu0
        %509 = vmatprep.subr.bf16.mxu0 0
        %510 = vmatpush1.bf16.msra.mxu0 %v441
        %511 = vmatprep.subr.bf16.mxu0 0
        %512 = vmatpush1.bf16.msra.mxu0 %v438
        %513 = vmatprep.subr.bf16.mxu0 0
        %514 = vmatpush1.bf16.msra.mxu0 %v435
        %515 = vmatprep.subr.bf16.mxu0 0
        %516 = vmatpush1.bf16.msra.mxu0 %v432
        %517 = vmatprep.subr.bf16.mxu0 0
        %518 = vmatpush1.bf16.msra.mxu0 %v429
        %519 = vmatprep.subr.bf16.mxu0 0
        %520 = vmatpush1.bf16.msra.mxu0 %v426
        %521 = vmatprep.subr.bf16.mxu0 0
        %522 = vmatpush1.bf16.msra.mxu0 %v423
        %523 = vmatprep.subr.bf16.mxu0 0
        %524 = vmatpush1.bf16.msra.mxu0 %v420
        %525 = vmatprep.subr.bf16.mxu0 0
        %526 = vmatpush2.bf16.msra.mxu0 0
        %527 = vmatprep.subr.bf16.mxu0 0
        %528 = vmatpush2.bf16.msra.mxu0 0
        %529 = vmatprep.subr.bf16.mxu0 0
        %530 = vmatpush2.bf16.msra.mxu0 0
        %531 = vmatprep.subr.bf16.mxu0 0
        %532 = vmatpush2.bf16.msra.mxu0 0
        %533 = vmatprep.subr.bf16.mxu0 0
        %534 = vmatpush2.bf16.msra.mxu0 0
        %535 = vmatprep.subr.bf16.mxu0 0
        %536 = vmatpush2.bf16.msra.mxu0 0
        %537 = vmatprep.subr.bf16.mxu0 0
        %538 = vmatpush2.bf16.msra.mxu0 0
        %539 = vmatprep.subr.bf16.mxu0 0
        %540 = vmatpush2.bf16.msra.mxu0 0
        %541 = vmatprep.mubr.bf16.mxu0 0
        %542 = vmatmul.mubr.bf16.gmra.mxu0 %v288
        %v543 = vpop.f32.mrf.mxu0
        %v544 = vadd.f32 %v334, %v543
        %v545 = vpop.f32.mrf.mxu0
        %v546 = vpop.f32.mrf.mxu0
        %v547 = vadd.f32 %v334, %v546
        %v548 = vpop.f32.mrf.mxu0
        %549 = vdwg.mxu0
        %v550 = vpack.c.bf16 %v505, %v501
        %v551 = vpack.c.bf16 %v507, %v503
        %v552 = vpack.c.bf16 %v547, %v544
        %vm553 = vcmask 261120
        %v555 = vsel %vm553, %v550, 0
        %v558 = vsel %vm553, %v551, 0
        %560 = vmatprep.subr.bf16.mxu0 0
        %561 = vmatpush1.bf16.xpose.msra.mxu0 0
        %562 = vmatprep.subr.bf16.mxu0 0
        %563 = vmatpush1.bf16.xpose.msra.mxu0 0
        %564 = vmatprep.subr.bf16.mxu0 0
        %565 = vmatpush1.bf16.xpose.msra.mxu0 0
        %566 = vmatprep.subr.bf16.mxu0 0
        %567 = vmatpush1.bf16.xpose.msra.mxu0 0
        %568 = vmatprep.subr.bf16.mxu0 0
        %569 = vmatpush1.bf16.xpose.msra.mxu0 0
        %570 = vmatprep.subr.bf16.mxu0 0
        %571 = vmatpush1.bf16.xpose.msra.mxu0 0
        %572 = vmatprep.subr.bf16.mxu0 0
        %573 = vmatpush1.bf16.xpose.msra.mxu0 0
        %574 = vmatprep.subr.bf16.mxu0 0
        %575 = vmatpush1.bf16.xpose.msra.mxu0 %v558
        %576 = vmatprep.subr.bf16.mxu0 0
        %577 = vmatpush2.bf16.xpose.msra.mxu0 0
        %578 = vmatprep.subr.bf16.mxu0 0
        %579 = vmatpush2.bf16.xpose.msra.mxu0 0
        %580 = vmatprep.subr.bf16.mxu0 0
        %581 = vmatpush2.bf16.xpose.msra.mxu0 0
        %582 = vmatprep.subr.bf16.mxu0 0
        %583 = vmatpush2.bf16.xpose.msra.mxu0 0
        %584 = vmatprep.subr.bf16.mxu0 0
        %585 = vmatpush2.bf16.xpose.msra.mxu0 0
        %586 = vmatprep.subr.bf16.mxu0 0
        %587 = vmatpush2.bf16.xpose.msra.mxu0 0
        %588 = vmatprep.subr.bf16.mxu0 0
        %589 = vmatpush2.bf16.xpose.msra.mxu0 0
        %590 = vmatprep.subr.bf16.mxu0 0
        %591 = vmatpush2.bf16.xpose.msra.mxu0 0
        %592 = vmatprep.mubr.bf16.mxu0 0
        %593 = vmatmul.mubr.bf16.gmra.mxu0 %v555
        %v594 = vpop.f32.mrf.mxu0
        %v595 = vadd.f32 0.0, %v594
        %v596 = vpop.f32.mrf.mxu0
        %v597 = vpop.f32.mrf.mxu0
        %v598 = vadd.f32 0.0, %v597
        %v599 = vpop.f32.mrf.mxu0
        %600 = vdwg.mxu0
        %vm601 = vcmask 130048
        %v602 = vsel %vm601, %v595, -inf
        %603 = vmax.xlane.f32.xlu0 %v602
        %v604 = vpop.xlane.xlu0 %603
        %v605 = vsel %vm601, %v598, -inf
        %606 = vmax.xlane.f32.xlu0 %v605
        %v607 = vpop.xlane.xlu0 %606
        %v608 = vsub.f32 %v595, %v604
        %v609 = vsub.f32 %v598, %v607
        %v610 = vmul.f32 %v608, 1.442695
        %v611 = vpow.pop %v610
        %v612 = vmul.f32 %v609, 1.442695
        %v613 = vpow.pop %v612
        %v614 = vsel %vm601, %v611, 0.0
        %615 = vadd.xlane.f32.xlu0 %v614
        %v616 = vpop.xlane.xlu0 %615
        %v617 = vsel %vm601, %v613, 0.0
        %618 = vadd.xlane.f32.xlu0 %v617
        %v619 = vpop.xlane.xlu0 %618
        %v620 = vrcp.pop %v616
        %v621 = vrcp.pop %v619
        %v622 = vmul.f32 %v611, %v620
        %v623 = vmul.f32 %v613, %v621
        %v624 = vpack.c.bf16 %v623, %v622
        %v626 = vsel %vm601, %v624, 0
        %628 = vmatprep.subr.bf16.mxu0 0
        %629 = vmatpush1.bf16.msra.mxu0 0
        %630 = vmatprep.subr.bf16.mxu0 0
        %631 = vmatpush1.bf16.msra.mxu0 0
        %632 = vmatprep.subr.bf16.mxu0 0
        %633 = vmatpush1.bf16.msra.mxu0 0
        %634 = vmatprep.subr.bf16.mxu0 0
        %635 = vmatpush1.bf16.msra.mxu0 0
        %636 = vmatprep.subr.bf16.mxu0 0
        %637 = vmatpush1.bf16.msra.mxu0 0
        %638 = vmatprep.subr.bf16.mxu0 0
        %639 = vmatpush1.bf16.msra.mxu0 0
        %640 = vmatprep.subr.bf16.mxu0 0
        %641 = vmatpush1.bf16.msra.mxu0 0
        %642 = vmatprep.subr.bf16.mxu0 0
        %643 = vmatpush1.bf16.msra.mxu0 %v552
        %644 = vmatprep.subr.bf16.mxu0 0
        %645 = vmatpush2.bf16.msra.mxu0 0
        %646 = vmatprep.subr.bf16.mxu0 0
        %647 = vmatpush2.bf16.msra.mxu0 0
        %648 = vmatprep.subr.bf16.mxu0 0
        %649 = vmatpush2.bf16.msra.mxu0 0
        %650 = vmatprep.subr.bf16.mxu0 0
        %651 = vmatpush2.bf16.msra.mxu0 0
        %652 = vmatprep.subr.bf16.mxu0 0
        %653 = vmatpush2.bf16.msra.mxu0 0
        %654 = vmatprep.subr.bf16.mxu0 0
        %655 = vmatpush2.bf16.msra.mxu0 0
        %656 = vmatprep.subr.bf16.mxu0 0
        %657 = vmatpush2.bf16.msra.mxu0 0
        %658 = vmatprep.subr.bf16.mxu0 0
        %659 = vmatpush2.bf16.msra.mxu0 0
        %660 = vmatprep.mubr.bf16.mxu0 0
        %661 = vmatmul.mubr.bf16.gmra.mxu0 %v626
        %v662 = vpop.f32.mrf.mxu0
        %v663 = vadd.f32 0.0, %v662
        %v664 = vpop.f32.mrf.mxu0
        %v665 = vpop.f32.mrf.mxu0
        %v666 = vadd.f32 0.0, %v665
        %v667 = vpop.f32.mrf.mxu0
        %668 = vdwg.mxu0
        %v669 = vpack.c.bf16 %v666, %v663
        %v670 = vld [vmem:[#allocation8] sm:$0xf]
        %v671 = vld [vmem:[#allocation8 + $0x4] sm:$0xf]
        %v672 = vld [vmem:[#allocation8 + $0x8] sm:$0xf]
        %v673 = vld [vmem:[#allocation8 + $0xc] sm:$0xf]
        %675 = vrot.lane.b32.xlu0 %v550, 96
        %v676 = vpop.permute.xlu0 %675
        %678 = vrot.lane.b32.xlu0 %v551, 96
        %v679 = vpop.permute.xlu0 %678
        %v681 = vsel %vm553, %v676, 0
        %v684 = vsel %vm553, %v679, 0
        %686 = vmatprep.subr.bf16.mxu0 0
        %687 = vmatpush1.bf16.xpose.msra.mxu0 0
        %688 = vmatprep.subr.bf16.mxu0 0
        %689 = vmatpush1.bf16.xpose.msra.mxu0 0
        %690 = vmatprep.subr.bf16.mxu0 0
        %691 = vmatpush1.bf16.xpose.msra.mxu0 0
        %692 = vmatprep.subr.bf16.mxu0 0
        %693 = vmatpush1.bf16.xpose.msra.mxu0 0
        %694 = vmatprep.subr.bf16.mxu0 0
        %695 = vmatpush1.bf16.xpose.msra.mxu0 0
        %696 = vmatprep.subr.bf16.mxu0 0
        %697 = vmatpush1.bf16.xpose.msra.mxu0 0
        %698 = vmatprep.subr.bf16.mxu0 0
        %699 = vmatpush1.bf16.xpose.msra.mxu0 0
        %700 = vmatprep.subr.bf16.mxu0 0
        %701 = vmatpush1.bf16.xpose.msra.mxu0 %v684
        %702 = vmatprep.subr.bf16.mxu0 0
        %703 = vmatpush2.bf16.xpose.msra.mxu0 0
        %704 = vmatprep.subr.bf16.mxu0 0
        %705 = vmatpush2.bf16.xpose.msra.mxu0 0
        %706 = vmatprep.subr.bf16.mxu0 0
        %707 = vmatpush2.bf16.xpose.msra.mxu0 0
        %708 = vmatprep.subr.bf16.mxu0 0
        %709 = vmatpush2.bf16.xpose.msra.mxu0 0
        %710 = vmatprep.subr.bf16.mxu0 0
        %711 = vmatpush2.bf16.xpose.msra.mxu0 0
        %712 = vmatprep.subr.bf16.mxu0 0
        %713 = vmatpush2.bf16.xpose.msra.mxu0 0
        %714 = vmatprep.subr.bf16.mxu0 0
        %715 = vmatpush2.bf16.xpose.msra.mxu0 0
        %716 = vmatprep.subr.bf16.mxu0 0
        %717 = vmatpush2.bf16.xpose.msra.mxu0 0
        %718 = vmatprep.mubr.bf16.mxu0 0
        %719 = vmatmul.mubr.bf16.gmra.mxu0 %v681
        %v720 = vpop.f32.mrf.mxu0
        %v721 = vadd.f32 0.0, %v720
        %v722 = vpop.f32.mrf.mxu0
        %v723 = vpop.f32.mrf.mxu0
        %v724 = vadd.f32 0.0, %v723
        %v725 = vpop.f32.mrf.mxu0
        %726 = vdwg.mxu0
        %v727 = vsel %vm601, %v721, -inf
        %728 = vmax.xlane.f32.xlu0 %v727
        %v729 = vpop.xlane.xlu0 %728
        %v730 = vsel %vm601, %v724, -inf
        %731 = vmax.xlane.f32.xlu0 %v730
        %v732 = vpop.xlane.xlu0 %731
        %v733 = vsub.f32 %v721, %v729
        %v734 = vsub.f32 %v724, %v732
        %v735 = vmul.f32 %v733, 1.442695
        %v736 = vpow.pop %v735
        %v737 = vmul.f32 %v734, 1.442695
        %v738 = vpow.pop %v737
        %v739 = vsel %vm601, %v736, 0.0
        %740 = vadd.xlane.f32.xlu0 %v739
        %v741 = vpop.xlane.xlu0 %740
        %v742 = vsel %vm601, %v738, 0.0
        %743 = vadd.xlane.f32.xlu0 %v742
        %v744 = vpop.xlane.xlu0 %743
        %v745 = vrcp.pop %v741
        %v746 = vrcp.pop %v744
        %v747 = vmul.f32 %v736, %v745
        %v748 = vmul.f32 %v738, %v746
        %v749 = vpack.c.bf16 %v748, %v747
        %751 = vrot.lane.b32.xlu0 %v552, 96
        %v752 = vpop.permute.xlu0 %751
        %v755 = vsel %vm601, %v749, 0
        %757 = vmatprep.subr.bf16.mxu0 0
        %758 = vmatpush1.bf16.msra.mxu0 0
        %759 = vmatprep.subr.bf16.mxu0 0
        %760 = vmatpush1.bf16.msra.mxu0 0
        %761 = vmatprep.subr.bf16.mxu0 0
        %762 = vmatpush1.bf16.msra.mxu0 0
        %763 = vmatprep.subr.bf16.mxu0 0
        %764 = vmatpush1.bf16.msra.mxu0 0
        %765 = vmatprep.subr.bf16.mxu0 0
        %766 = vmatpush1.bf16.msra.mxu0 0
        %767 = vmatprep.subr.bf16.mxu0 0
        %768 = vmatpush1.bf16.msra.mxu0 0
        %769 = vmatprep.subr.bf16.mxu0 0
        %770 = vmatpush1.bf16.msra.mxu0 0
        %771 = vmatprep.subr.bf16.mxu0 0
        %772 = vmatpush1.bf16.msra.mxu0 %v752
        %773 = vmatprep.subr.bf16.mxu0 0
        %774 = vmatpush2.bf16.msra.mxu0 0
        %775 = vmatprep.subr.bf16.mxu0 0
        %776 = vmatpush2.bf16.msra.mxu0 0
        %777 = vmatprep.subr.bf16.mxu0 0
        %778 = vmatpush2.bf16.msra.mxu0 0
        %779 = vmatprep.subr.bf16.mxu0 0
        %780 = vmatpush2.bf16.msra.mxu0 0
        %781 = vmatprep.subr.bf16.mxu0 0
        %782 = vmatpush2.bf16.msra.mxu0 0
        %783 = vmatprep.subr.bf16.mxu0 0
        %784 = vmatpush2.bf16.msra.mxu0 0
        %785 = vmatprep.subr.bf16.mxu0 0
        %786 = vmatpush2.bf16.msra.mxu0 0
        %787 = vmatprep.subr.bf16.mxu0 0
        %788 = vmatpush2.bf16.msra.mxu0 0
        %789 = vmatprep.mubr.bf16.mxu0 0
        %790 = vmatmul.mubr.bf16.gmra.mxu0 %v755
        %v791 = vpop.f32.mrf.mxu0
        %v792 = vadd.f32 0.0, %v791
        %v793 = vpop.f32.mrf.mxu0
        %v794 = vpop.f32.mrf.mxu0
        %v795 = vadd.f32 0.0, %v794
        %v796 = vpop.f32.mrf.mxu0
        %797 = vdwg.mxu0
        %v798 = vpack.c.bf16 %v795, %v792
        %v799 = vld [vmem:[#allocation8 + $0x10] sm:$0xf]
        %v800 = vld [vmem:[#allocation8 + $0x14] sm:$0xf]
        %v801 = vld [vmem:[#allocation8 + $0x18] sm:$0xf]
        %v802 = vld [vmem:[#allocation8 + $0x1c] sm:$0xf]
        %v807 = vunpack.c.l.b16 %v799
        %v808 = vunpack.c.l.b16 %v800
        %v809 = vunpack.c.l.b16 %v801
        %v810 = vunpack.c.l.b16 %v802
        %v811 = vpack.c.b16 %v808, %v807
        %v812 = vpack.c.b16 %v810, %v809
        %v816 = vsel %vm553, %v798, 0
        %818 = vmatprep.subr.bf16.mxu0 0
        %819 = vmatpush1.bf16.msra.mxu0 0
        %820 = vmatprep.subr.bf16.mxu0 0
        %821 = vmatpush1.bf16.msra.mxu0 0
        %822 = vmatprep.subr.bf16.mxu0 0
        %823 = vmatpush1.bf16.msra.mxu0 0
        %824 = vmatprep.subr.bf16.mxu0 0
        %825 = vmatpush1.bf16.msra.mxu0 0
        %826 = vmatprep.subr.bf16.mxu0 0
        %827 = vmatpush1.bf16.msra.mxu0 0
        %828 = vmatprep.subr.bf16.mxu0 0
        %829 = vmatpush1.bf16.msra.mxu0 0
        %830 = vmatprep.subr.bf16.mxu0 0
        %831 = vmatpush1.bf16.msra.mxu0 %v812
        %832 = vmatprep.subr.bf16.mxu0 0
        %833 = vmatpush1.bf16.msra.mxu0 %v811
        %834 = vmatprep.subr.bf16.mxu0 0
        %835 = vmatpush2.bf16.msra.mxu0 0
        %836 = vmatprep.subr.bf16.mxu0 0
        %837 = vmatpush2.bf16.msra.mxu0 0
        %838 = vmatprep.subr.bf16.mxu0 0
        %839 = vmatpush2.bf16.msra.mxu0 0
        %840 = vmatprep.subr.bf16.mxu0 0
        %841 = vmatpush2.bf16.msra.mxu0 0
        %842 = vmatprep.subr.bf16.mxu0 0
        %843 = vmatpush2.bf16.msra.mxu0 0
        %844 = vmatprep.subr.bf16.mxu0 0
        %845 = vmatpush2.bf16.msra.mxu0 0
        %846 = vmatprep.subr.bf16.mxu0 0
        %847 = vmatpush2.bf16.msra.mxu0 0
        %848 = vmatprep.subr.bf16.mxu0 0
        %849 = vmatpush2.bf16.msra.mxu0 0
        %850 = vmatprep.mubr.bf16.mxu0 0
        %851 = vmatmul.mubr.bf16.gmra.mxu0 %v816
        %v852 = vpop.f32.mrf.mxu0
        %v853 = vadd.f32 0.0, %v852
        %v854 = vpop.f32.mrf.mxu0
        %v855 = vpop.f32.mrf.mxu0
        %v856 = vadd.f32 0.0, %v855
        %v857 = vpop.f32.mrf.mxu0
        %858 = vdwg.mxu0
        %v863 = vunpack.c.l.b16 %v670
        %v864 = vunpack.c.l.b16 %v671
        %v865 = vunpack.c.l.b16 %v672
        %v866 = vunpack.c.l.b16 %v673
        %v867 = vpack.c.b16 %v864, %v863
        %v868 = vpack.c.b16 %v866, %v865
        %v872 = vsel %vm553, %v669, 0
        %874 = vmatprep.subr.bf16.mxu0 0
        %875 = vmatpush1.bf16.msra.mxu0 0
        %876 = vmatprep.subr.bf16.mxu0 0
        %877 = vmatpush1.bf16.msra.mxu0 0
        %878 = vmatprep.subr.bf16.mxu0 0
        %879 = vmatpush1.bf16.msra.mxu0 0
        %880 = vmatprep.subr.bf16.mxu0 0
        %881 = vmatpush1.bf16.msra.mxu0 0
        %882 = vmatprep.subr.bf16.mxu0 0
        %883 = vmatpush1.bf16.msra.mxu0 0
        %884 = vmatprep.subr.bf16.mxu0 0
        %885 = vmatpush1.bf16.msra.mxu0 0
        %886 = vmatprep.subr.bf16.mxu0 0
        %887 = vmatpush1.bf16.msra.mxu0 %v868
        %888 = vmatprep.subr.bf16.mxu0 0
        %889 = vmatpush1.bf16.msra.mxu0 %v867
        %890 = vmatprep.subr.bf16.mxu0 0
        %891 = vmatpush2.bf16.msra.mxu0 0
        %892 = vmatprep.subr.bf16.mxu0 0
        %893 = vmatpush2.bf16.msra.mxu0 0
        %894 = vmatprep.subr.bf16.mxu0 0
        %895 = vmatpush2.bf16.msra.mxu0 0
        %896 = vmatprep.subr.bf16.mxu0 0
        %897 = vmatpush2.bf16.msra.mxu0 0
        %898 = vmatprep.subr.bf16.mxu0 0
        %899 = vmatpush2.bf16.msra.mxu0 0
        %900 = vmatprep.subr.bf16.mxu0 0
        %901 = vmatpush2.bf16.msra.mxu0 0
        %902 = vmatprep.subr.bf16.mxu0 0
        %903 = vmatpush2.bf16.msra.mxu0 0
        %904 = vmatprep.subr.bf16.mxu0 0
        %905 = vmatpush2.bf16.msra.mxu0 0
        %906 = vmatprep.mubr.bf16.mxu0 0
        %907 = vmatmul.mubr.bf16.gmra.mxu0 %v872
        %v908 = vpop.f32.mrf.mxu0
        %v909 = vadd.f32 %v853, %v908
        %v910 = vpop.f32.mrf.mxu0
        %v911 = vpop.f32.mrf.mxu0
        %v912 = vadd.f32 %v856, %v911
        %v913 = vpop.f32.mrf.mxu0
        %914 = vdwg.mxu0
        %915 = vrot.lane.b32.xlu0 %v550, 64
        %v916 = vpop.permute.xlu0 %915
        %917 = vrot.lane.b32.xlu0 %v551, 64
        %v918 = vpop.permute.xlu0 %917
        %v920 = vsel %vm553, %v916, 0
        %v923 = vsel %vm553, %v918, 0
        %925 = vmatprep.subr.bf16.mxu0 0
        %926 = vmatpush1.bf16.xpose.msra.mxu0 0
        %927 = vmatprep.subr.bf16.mxu0 0
        %928 = vmatpush1.bf16.xpose.msra.mxu0 0
        %929 = vmatprep.subr.bf16.mxu0 0
        %930 = vmatpush1.bf16.xpose.msra.mxu0 0
        %931 = vmatprep.subr.bf16.mxu0 0
        %932 = vmatpush1.bf16.xpose.msra.mxu0 0
        %933 = vmatprep.subr.bf16.mxu0 0
        %934 = vmatpush1.bf16.xpose.msra.mxu0 0
        %935 = vmatprep.subr.bf16.mxu0 0
        %936 = vmatpush1.bf16.xpose.msra.mxu0 0
        %937 = vmatprep.subr.bf16.mxu0 0
        %938 = vmatpush1.bf16.xpose.msra.mxu0 0
        %939 = vmatprep.subr.bf16.mxu0 0
        %940 = vmatpush1.bf16.xpose.msra.mxu0 %v923
        %941 = vmatprep.subr.bf16.mxu0 0
        %942 = vmatpush2.bf16.xpose.msra.mxu0 0
        %943 = vmatprep.subr.bf16.mxu0 0
        %944 = vmatpush2.bf16.xpose.msra.mxu0 0
        %945 = vmatprep.subr.bf16.mxu0 0
        %946 = vmatpush2.bf16.xpose.msra.mxu0 0
        %947 = vmatprep.subr.bf16.mxu0 0
        %948 = vmatpush2.bf16.xpose.msra.mxu0 0
        %949 = vmatprep.subr.bf16.mxu0 0
        %950 = vmatpush2.bf16.xpose.msra.mxu0 0
        %951 = vmatprep.subr.bf16.mxu0 0
        %952 = vmatpush2.bf16.xpose.msra.mxu0 0
        %953 = vmatprep.subr.bf16.mxu0 0
        %954 = vmatpush2.bf16.xpose.msra.mxu0 0
        %955 = vmatprep.subr.bf16.mxu0 0
        %956 = vmatpush2.bf16.xpose.msra.mxu0 0
        %957 = vmatprep.mubr.bf16.mxu0 0
        %958 = vmatmul.mubr.bf16.gmra.mxu0 %v920
        %v959 = vpop.f32.mrf.mxu0
        %v960 = vadd.f32 0.0, %v959
        %v961 = vpop.f32.mrf.mxu0
        %v962 = vpop.f32.mrf.mxu0
        %v963 = vadd.f32 0.0, %v962
        %v964 = vpop.f32.mrf.mxu0
        %965 = vdwg.mxu0
        %v966 = vsel %vm601, %v960, -inf
        %967 = vmax.xlane.f32.xlu0 %v966
        %v968 = vpop.xlane.xlu0 %967
        %v969 = vsel %vm601, %v963, -inf
        %970 = vmax.xlane.f32.xlu0 %v969
        %v971 = vpop.xlane.xlu0 %970
        %v972 = vsub.f32 %v960, %v968
        %v973 = vsub.f32 %v963, %v971
        %v974 = vmul.f32 %v972, 1.442695
        %v975 = vpow.pop %v974
        %v976 = vmul.f32 %v973, 1.442695
        %v977 = vpow.pop %v976
        %v978 = vsel %vm601, %v975, 0.0
        %979 = vadd.xlane.f32.xlu0 %v978
        %v980 = vpop.xlane.xlu0 %979
        %v981 = vsel %vm601, %v977, 0.0
        %982 = vadd.xlane.f32.xlu0 %v981
        %v983 = vpop.xlane.xlu0 %982
        %v984 = vrcp.pop %v980
        %v985 = vrcp.pop %v983
        %v986 = vmul.f32 %v975, %v984
        %v987 = vmul.f32 %v977, %v985
        %v988 = vpack.c.bf16 %v987, %v986
        %989 = vrot.lane.b32.xlu0 %v552, 64
        %v990 = vpop.permute.xlu0 %989
        %v993 = vsel %vm601, %v988, 0
        %995 = vmatprep.subr.bf16.mxu0 0
        %996 = vmatpush1.bf16.msra.mxu0 0
        %997 = vmatprep.subr.bf16.mxu0 0
        %998 = vmatpush1.bf16.msra.mxu0 0
        %999 = vmatprep.subr.bf16.mxu0 0
        %1000 = vmatpush1.bf16.msra.mxu0 0
        %1001 = vmatprep.subr.bf16.mxu0 0
        %1002 = vmatpush1.bf16.msra.mxu0 0
        %1003 = vmatprep.subr.bf16.mxu0 0
        %1004 = vmatpush1.bf16.msra.mxu0 0
        %1005 = vmatprep.subr.bf16.mxu0 0
        %1006 = vmatpush1.bf16.msra.mxu0 0
        %1007 = vmatprep.subr.bf16.mxu0 0
        %1008 = vmatpush1.bf16.msra.mxu0 0
        %1009 = vmatprep.subr.bf16.mxu0 0
        %1010 = vmatpush1.bf16.msra.mxu0 %v990
        %1011 = vmatprep.subr.bf16.mxu0 0
        %1012 = vmatpush2.bf16.msra.mxu0 0
        %1013 = vmatprep.subr.bf16.mxu0 0
        %1014 = vmatpush2.bf16.msra.mxu0 0
        %1015 = vmatprep.subr.bf16.mxu0 0
        %1016 = vmatpush2.bf16.msra.mxu0 0
        %1017 = vmatprep.subr.bf16.mxu0 0
        %1018 = vmatpush2.bf16.msra.mxu0 0
        %1019 = vmatprep.subr.bf16.mxu0 0
        %1020 = vmatpush2.bf16.msra.mxu0 0
        %1021 = vmatprep.subr.bf16.mxu0 0
        %1022 = vmatpush2.bf16.msra.mxu0 0
        %1023 = vmatprep.subr.bf16.mxu0 0
        %1024 = vmatpush2.bf16.msra.mxu0 0
        %1025 = vmatprep.subr.bf16.mxu0 0
        %1026 = vmatpush2.bf16.msra.mxu0 0
        %1027 = vmatprep.mubr.bf16.mxu0 0
        %1028 = vmatmul.mubr.bf16.gmra.mxu0 %v993
        %v1029 = vpop.f32.mrf.mxu0
        %v1030 = vadd.f32 0.0, %v1029
        %v1031 = vpop.f32.mrf.mxu0
        %v1032 = vpop.f32.mrf.mxu0
        %v1033 = vadd.f32 0.0, %v1032
        %v1034 = vpop.f32.mrf.mxu0
        %1035 = vdwg.mxu0
        %v1036 = vpack.c.bf16 %v1033, %v1030
        %v1037 = vld [vmem:[#allocation8 + $0x20] sm:$0xf]
        %v1038 = vld [vmem:[#allocation8 + $0x24] sm:$0xf]
        %v1039 = vld [vmem:[#allocation8 + $0x28] sm:$0xf]
        %v1040 = vld [vmem:[#allocation8 + $0x2c] sm:$0xf]
        %v1045 = vunpack.c.l.b16 %v1037
        %v1046 = vunpack.c.l.b16 %v1038
        %v1047 = vunpack.c.l.b16 %v1039
        %v1048 = vunpack.c.l.b16 %v1040
        %v1049 = vpack.c.b16 %v1046, %v1045
        %v1050 = vpack.c.b16 %v1048, %v1047
        %v1054 = vsel %vm553, %v1036, 0
        %1056 = vmatprep.subr.bf16.mxu0 0
        %1057 = vmatpush1.bf16.msra.mxu0 0
        %1058 = vmatprep.subr.bf16.mxu0 0
        %1059 = vmatpush1.bf16.msra.mxu0 0
        %1060 = vmatprep.subr.bf16.mxu0 0
        %1061 = vmatpush1.bf16.msra.mxu0 0
        %1062 = vmatprep.subr.bf16.mxu0 0
        %1063 = vmatpush1.bf16.msra.mxu0 0
        %1064 = vmatprep.subr.bf16.mxu0 0
        %1065 = vmatpush1.bf16.msra.mxu0 0
        %1066 = vmatprep.subr.bf16.mxu0 0
        %1067 = vmatpush1.bf16.msra.mxu0 0
        %1068 = vmatprep.subr.bf16.mxu0 0
        %1069 = vmatpush1.bf16.msra.mxu0 %v1050
        %1070 = vmatprep.subr.bf16.mxu0 0
        %1071 = vmatpush1.bf16.msra.mxu0 %v1049
        %1072 = vmatprep.subr.bf16.mxu0 0
        %1073 = vmatpush2.bf16.msra.mxu0 0
        %1074 = vmatprep.subr.bf16.mxu0 0
        %1075 = vmatpush2.bf16.msra.mxu0 0
        %1076 = vmatprep.subr.bf16.mxu0 0
        %1077 = vmatpush2.bf16.msra.mxu0 0
        %1078 = vmatprep.subr.bf16.mxu0 0
        %1079 = vmatpush2.bf16.msra.mxu0 0
        %1080 = vmatprep.subr.bf16.mxu0 0
        %1081 = vmatpush2.bf16.msra.mxu0 0
        %1082 = vmatprep.subr.bf16.mxu0 0
        %1083 = vmatpush2.bf16.msra.mxu0 0
        %1084 = vmatprep.subr.bf16.mxu0 0
        %1085 = vmatpush2.bf16.msra.mxu0 0
        %1086 = vmatprep.subr.bf16.mxu0 0
        %1087 = vmatpush2.bf16.msra.mxu0 0
        %1088 = vmatprep.mubr.bf16.mxu0 0
        %1089 = vmatmul.mubr.bf16.gmra.mxu0 %v1054
        %v1090 = vpop.f32.mrf.mxu0
        %v1091 = vadd.f32 0.0, %v1090
        %v1092 = vpop.f32.mrf.mxu0
        %v1093 = vpop.f32.mrf.mxu0
        %v1094 = vadd.f32 0.0, %v1093
        %v1095 = vpop.f32.mrf.mxu0
        %1096 = vdwg.mxu0
        %v1097 = vadd.f32 %v909, %v1091
        %v1098 = vadd.f32 %v912, %v1094
        %1099 = vrot.lane.b32.xlu0 %v550, 32
        %v1100 = vpop.permute.xlu0 %1099
        %1101 = vrot.lane.b32.xlu0 %v551, 32
        %v1102 = vpop.permute.xlu0 %1101
        %v1104 = vsel %vm553, %v1100, 0
        %v1107 = vsel %vm553, %v1102, 0
        %1109 = vmatprep.subr.bf16.mxu0 0
        %1110 = vmatpush1.bf16.xpose.msra.mxu0 0
        %1111 = vmatprep.subr.bf16.mxu0 0
        %1112 = vmatpush1.bf16.xpose.msra.mxu0 0
        %1113 = vmatprep.subr.bf16.mxu0 0
        %1114 = vmatpush1.bf16.xpose.msra.mxu0 0
        %1115 = vmatprep.subr.bf16.mxu0 0
        %1116 = vmatpush1.bf16.xpose.msra.mxu0 0
        %1117 = vmatprep.subr.bf16.mxu0 0
        %1118 = vmatpush1.bf16.xpose.msra.mxu0 0
        %1119 = vmatprep.subr.bf16.mxu0 0
        %1120 = vmatpush1.bf16.xpose.msra.mxu0 0
        %1121 = vmatprep.subr.bf16.mxu0 0
        %1122 = vmatpush1.bf16.xpose.msra.mxu0 0
        %1123 = vmatprep.subr.bf16.mxu0 0
        %1124 = vmatpush1.bf16.xpose.msra.mxu0 %v1107
        %1125 = vmatprep.subr.bf16.mxu0 0
        %1126 = vmatpush2.bf16.xpose.msra.mxu0 0
        %1127 = vmatprep.subr.bf16.mxu0 0
        %1128 = vmatpush2.bf16.xpose.msra.mxu0 0
        %1129 = vmatprep.subr.bf16.mxu0 0
        %1130 = vmatpush2.bf16.xpose.msra.mxu0 0
        %1131 = vmatprep.subr.bf16.mxu0 0
        %1132 = vmatpush2.bf16.xpose.msra.mxu0 0
        %1133 = vmatprep.subr.bf16.mxu0 0
        %1134 = vmatpush2.bf16.xpose.msra.mxu0 0
        %1135 = vmatprep.subr.bf16.mxu0 0
        %1136 = vmatpush2.bf16.xpose.msra.mxu0 0
        %1137 = vmatprep.subr.bf16.mxu0 0
        %1138 = vmatpush2.bf16.xpose.msra.mxu0 0
        %1139 = vmatprep.subr.bf16.mxu0 0
        %1140 = vmatpush2.bf16.xpose.msra.mxu0 0
        %1141 = vmatprep.mubr.bf16.mxu0 0
        %1142 = vmatmul.mubr.bf16.gmra.mxu0 %v1104
        %v1143 = vpop.f32.mrf.mxu0
        %v1144 = vadd.f32 0.0, %v1143
        %v1145 = vpop.f32.mrf.mxu0
        %v1146 = vpop.f32.mrf.mxu0
        %v1147 = vadd.f32 0.0, %v1146
        %v1148 = vpop.f32.mrf.mxu0
        %1149 = vdwg.mxu0
        %v1150 = vsel %vm601, %v1144, -inf
        %1151 = vmax.xlane.f32.xlu0 %v1150
        %v1152 = vpop.xlane.xlu0 %1151
        %v1153 = vsel %vm601, %v1147, -inf
        %1154 = vmax.xlane.f32.xlu0 %v1153
        %v1155 = vpop.xlane.xlu0 %1154
        %v1156 = vsub.f32 %v1144, %v1152
        %v1157 = vsub.f32 %v1147, %v1155
        %v1158 = vmul.f32 %v1156, 1.442695
        %v1159 = vpow.pop %v1158
        %v1160 = vmul.f32 %v1157, 1.442695
        %v1161 = vpow.pop %v1160
        %v1162 = vsel %vm601, %v1159, 0.0
        %1163 = vadd.xlane.f32.xlu0 %v1162
        %v1164 = vpop.xlane.xlu0 %1163
        %v1165 = vsel %vm601, %v1161, 0.0
        %1166 = vadd.xlane.f32.xlu0 %v1165
        %v1167 = vpop.xlane.xlu0 %1166
        %v1168 = vrcp.pop %v1164
        %v1169 = vrcp.pop %v1167
        %v1170 = vmul.f32 %v1159, %v1168
        %v1171 = vmul.f32 %v1161, %v1169
        %v1172 = vpack.c.bf16 %v1171, %v1170
        %1173 = vrot.lane.b32.xlu0 %v552, 32
        %v1174 = vpop.permute.xlu0 %1173
        %v1177 = vsel %vm601, %v1172, 0
        %1179 = vmatprep.subr.bf16.mxu0 0
        %1180 = vmatpush1.bf16.msra.mxu0 0
        %1181 = vmatprep.subr.bf16.mxu0 0
        %1182 = vmatpush1.bf16.msra.mxu0 0
        %1183 = vmatprep.subr.bf16.mxu0 0
        %1184 = vmatpush1.bf16.msra.mxu0 0
        %1185 = vmatprep.subr.bf16.mxu0 0
        %1186 = vmatpush1.bf16.msra.mxu0 0
        %1187 = vmatprep.subr.bf16.mxu0 0
        %1188 = vmatpush1.bf16.msra.mxu0 0
        %1189 = vmatprep.subr.bf16.mxu0 0
        %1190 = vmatpush1.bf16.msra.mxu0 0
        %1191 = vmatprep.subr.bf16.mxu0 0
        %1192 = vmatpush1.bf16.msra.mxu0 0
        %1193 = vmatprep.subr.bf16.mxu0 0
        %1194 = vmatpush1.bf16.msra.mxu0 %v1174
        %1195 = vmatprep.subr.bf16.mxu0 0
        %1196 = vmatpush2.bf16.msra.mxu0 0
        %1197 = vmatprep.subr.bf16.mxu0 0
        %1198 = vmatpush2.bf16.msra.mxu0 0
        %1199 = vmatprep.subr.bf16.mxu0 0
        %1200 = vmatpush2.bf16.msra.mxu0 0
        %1201 = vmatprep.subr.bf16.mxu0 0
        %1202 = vmatpush2.bf16.msra.mxu0 0
        %1203 = vmatprep.subr.bf16.mxu0 0
        %1204 = vmatpush2.bf16.msra.mxu0 0
        %1205 = vmatprep.subr.bf16.mxu0 0
        %1206 = vmatpush2.bf16.msra.mxu0 0
        %1207 = vmatprep.subr.bf16.mxu0 0
        %1208 = vmatpush2.bf16.msra.mxu0 0
        %1209 = vmatprep.subr.bf16.mxu0 0
        %1210 = vmatpush2.bf16.msra.mxu0 0
        %1211 = vmatprep.mubr.bf16.mxu0 0
        %1212 = vmatmul.mubr.bf16.gmra.mxu0 %v1177
        %v1213 = vpop.f32.mrf.mxu0
        %v1214 = vadd.f32 0.0, %v1213
        %v1215 = vpop.f32.mrf.mxu0
        %v1216 = vpop.f32.mrf.mxu0
        %v1217 = vadd.f32 0.0, %v1216
        %v1218 = vpop.f32.mrf.mxu0
        %1219 = vdwg.mxu0
        %v1220 = vpack.c.bf16 %v1217, %v1214
        %v1221 = vld [vmem:[#allocation8 + $0x30] sm:$0xf]
        %v1222 = vld [vmem:[#allocation8 + $0x34] sm:$0xf]
        %v1223 = vld [vmem:[#allocation8 + $0x38] sm:$0xf]
        %v1224 = vld [vmem:[#allocation8 + $0x3c] sm:$0xf]
        %v1229 = vunpack.c.l.b16 %v1221
        %v1230 = vunpack.c.l.b16 %v1222
        %v1231 = vunpack.c.l.b16 %v1223
        %v1232 = vunpack.c.l.b16 %v1224
        %v1233 = vpack.c.b16 %v1230, %v1229
        %v1234 = vpack.c.b16 %v1232, %v1231
        %v1238 = vsel %vm553, %v1220, 0
        %1240 = vmatprep.subr.bf16.mxu0 0
        %1241 = vmatpush1.bf16.msra.mxu0 0
        %1242 = vmatprep.subr.bf16.mxu0 0
        %1243 = vmatpush1.bf16.msra.mxu0 0
        %1244 = vmatprep.subr.bf16.mxu0 0
        %1245 = vmatpush1.bf16.msra.mxu0 0
        %1246 = vmatprep.subr.bf16.mxu0 0
        %1247 = vmatpush1.bf16.msra.mxu0 0
        %1248 = vmatprep.subr.bf16.mxu0 0
        %1249 = vmatpush1.bf16.msra.mxu0 0
        %1250 = vmatprep.subr.bf16.mxu0 0
        %1251 = vmatpush1.bf16.msra.mxu0 0
        %1252 = vmatprep.subr.bf16.mxu0 0
        %1253 = vmatpush1.bf16.msra.mxu0 %v1234
        %1254 = vmatprep.subr.bf16.mxu0 0
        %1255 = vmatpush1.bf16.msra.mxu0 %v1233
        %1256 = vmatprep.subr.bf16.mxu0 0
        %1257 = vmatpush2.bf16.msra.mxu0 0
        %1258 = vmatprep.subr.bf16.mxu0 0
        %1259 = vmatpush2.bf16.msra.mxu0 0
        %1260 = vmatprep.subr.bf16.mxu0 0
        %1261 = vmatpush2.bf16.msra.mxu0 0
        %1262 = vmatprep.subr.bf16.mxu0 0
        %1263 = vmatpush2.bf16.msra.mxu0 0
        %1264 = vmatprep.subr.bf16.mxu0 0
        %1265 = vmatpush2.bf16.msra.mxu0 0
        %1266 = vmatprep.subr.bf16.mxu0 0
        %1267 = vmatpush2.bf16.msra.mxu0 0
        %1268 = vmatprep.subr.bf16.mxu0 0
        %1269 = vmatpush2.bf16.msra.mxu0 0
        %1270 = vmatprep.subr.bf16.mxu0 0
        %1271 = vmatpush2.bf16.msra.mxu0 0
        %1272 = vmatprep.mubr.bf16.mxu0 0
        %1273 = vmatmul.mubr.bf16.gmra.mxu0 %v1238
        %v1274 = vpop.f32.mrf.mxu0
        %v1275 = vadd.f32 0.0, %v1274
        %v1276 = vpop.f32.mrf.mxu0
        %v1277 = vpop.f32.mrf.mxu0
        %v1278 = vadd.f32 0.0, %v1277
        %v1279 = vpop.f32.mrf.mxu0
        %1280 = vdwg.mxu0
        %v1281 = vadd.f32 %v1097, %v1275
        %v1282 = vadd.f32 %v1098, %v1278
        %v1283 = vld [vmem:[%s4] sm:$0x1]
        %v1285 = vlaneseq
        %v1286 = vshrl.u32 %v1285, 7
        %v1287 = vsub.s32 0, %v1286
        %v1288 = vrot.slane %v1283, %v1287
        %v1290 = vadd.f32 %v1281, %v1288
        %v1291 = vadd.f32 %v1282, %v1288
        %1292 = vst [vmem:[%s284] sm:$0xff] %v1290
        %1293 = vst [vmem:[%s284 + $0x8] sm:$0xff] %v1291
        %s1294 = sand.u32 %s142, 1
        %s1295 = scalar_lea.sflag [#allocation4], %s1294
        %s1296 = sand.u32 %s142, 1
        %s1297 = smul.addr %s1296, 16
        %s1298 = scalar_lea.vmem [#allocation10], %s1297
        // Predicated region
        $region57: #{attention_forward.1} parent=39 // pred_check
          %p1299 = pneg %p152
        $region58: #{attention_forward.1} parent=39 // pred_check_branch
          %1301 = sbr.rel (%p1299) target = $region60
        $region59: #{attention_forward.1} parent=39 // pred_region
          %s1303 = ssub.s32 256, 256
          %1304 = vsyncadd %s1295, %s1303
          %s1305 = smul.addr %s24, 2
          %s1306 = smul.addr %s1305, 128
          %s1307 = scalar_lea.hbm %s5, %s1306
          %s1308 = sshll.u32 %s1298, 4
          %s1309 = int_to_ptr.vmem [resolvable:$true] %s1308
          %1314 = dma.vmem_to_hbm [thread:$0]  %s1309, 256, %s1307, %s1295, 128, 128, 8
        $region60: #{attention_forward.1} parent=39 // pred_fallthru
          _
      $region40: #{attention_forward.1} parent=5 // pred_fallthru
        _
      %p1315 = scmp.le.s32.totalorder 2, %s19
      // Predicated region
      $region61: #{attention_forward.1} parent=5 // pred_check
        %p1316 = pneg %p1315
      $region62: #{attention_forward.1} parent=5 // pred_check_branch
        %1318 = sbr.rel (%p1316) target = $region64
      $region63: #{attention_forward.1} parent=5 // pred_region
        %s1319 = ssub.s32 %s19, 2
        // Predicated region
        $region65: #{attention_forward.1} parent=63 // pred_check
          %p1320 = pneg %p158
        $region66: #{attention_forward.1} parent=63 // pred_check_branch
          %1322 = sbr.rel (%p1320) target = $region68
        $region67: #{attention_forward.1} parent=63 // pred_region
          %s1323 = sand.u32 %s143, 1
          %s1324 = scalar_lea.sflag [#allocation4], %s1323
          %s1325 = sand.u32 %s143, 1
          %s1326 = smul.addr %s1325, 16
          %s1327 = scalar_lea.vmem [#allocation10], %s1326
          %1328 = dma.done %s1324, 256
        $region68: #{attention_forward.1} parent=63 // pred_fallthru
          _
      $region64: #{attention_forward.1} parent=5 // pred_fallthru
        _
    $region6: #{attention_forward.1} parent=1 // loop_footer
      %s23 = sadd.s32 1, %s19
    $region7: #{attention_forward.1} parent=1 // loop_footer_branch
      %18 = sbr.rel target = $region3
    $region8: #{attention_forward.1} parent=1 // loop_exit
      _
    %1329 = vsyncpa [#allocation3], 1
    %s1330 = scalar_lea.sflag [#allocation3], 1
    %1331 = vsyncpa %s1330, 1
    %1332 = vsyncpa [#allocation6], 1
    %1333 = vsyncpa [#allocation9], 1
    %1334 = vsyncpa [#allocation4], 1
    %s1335 = scalar_lea.sflag [#allocation4], 1
    %1336 = vsyncpa %s1335, 1

</llo_original>
